<compile_context>
chip_gen: v7x
topology: tpu7x:2x2x1
jax: 0.10.0
libtpu: 0.0.40
codegen_flags: <defaults>
</compile_context>

<pallas_src>
import functools

import jax
import jax.numpy as jnp
from jax.experimental import pallas as pl
from jax.experimental.pallas import tpu as pltpu

CIN = 3        # RGB input channels
CIN_P = 8      # image channels zero-padded so each conv1 tap block is sublane-aligned
HEAD_N = 128   # lane-dense fused head width: [box(4) | cls(num_classes) | zero pad]


def _conv_geom(h, w):
    """Output spatial size of a 3x3 / stride-2 / pad-1 convolution."""
    return (h + 2 - 3) // 2 + 1, (w + 2 - 3) // 2 + 1


# ----------------------------------------------------------------------------
# Single fused kernel: conv1 -> conv2 (slice/concat im2col) -> pool -> decoder
# One grid step == one image (grid axis marked "parallel").
# ----------------------------------------------------------------------------
def _diffusiondet_kernel(cols1_ref, w1_ref, b1_ref, w2_ref, b2_ref, boxes_ref,
                         wfp_ref, bfp_ref, wbe_ref, bbe_ref, wh_ref, bh_ref,
                         whead_ref, bhead_ref, out_ref, *, hw2, wo2, c1):
    # ---- conv1: one MXU pass over this image's HW1 patch rows ------------
    h1 = jnp.dot(cols1_ref[...], w1_ref[...], preferred_element_type=jnp.float32)
    h1 = jnp.maximum(h1 + b1_ref[...], 0.0)                    # (HW1, C1) f32

    # ---- conv2 im2col from parity blocks ----------------------------------
    # The wrapper ordered conv1 rows as 4 blocks of HW2 rows each:
    #   block k = pr*2 + pc holds conv1 output at (2*oy + pr, 2*ox + pc)
    # so every stride-2 tap of conv2 is a static slice / zero-prefixed shift.
    blk = [h1[k * hw2:(k + 1) * hw2, :] for k in range(4)]      # (HW2, C1) each

    def shift(x, k):                                            # rows shift down by k
        if k == 0:
            return x
        return jnp.concatenate(
            [jnp.zeros((k, c1), x.dtype), x[:hw2 - k, :]], axis=0)

    # rows with ox == 0 are out of range for dx == 0 taps
    col0 = (jax.lax.broadcasted_iota(jnp.int32, (hw2, c1), 0) % wo2) == 0

    def mask0(x):
        return jnp.where(col0, jnp.zeros_like(x), x)

    taps = (
        mask0(shift(blk[3], wo2 + 1)),   # tap (dy=0, dx=0)
        shift(blk[2], wo2),              # tap (0, 1)
        shift(blk[3], wo2),              # tap (0, 2)
        mask0(shift(blk[1], 1)),         # tap (1, 0)
        blk[0],                          # tap (1, 1)
        blk[1],                          # tap (1, 2)
        mask0(shift(blk[3], 1)),         # tap (2, 0)
        blk[2],                          # tap (2, 1)
        blk[3],                          # tap (2, 2)
    )
    cols2 = jnp.concatenate(taps, axis=-1).astype(jnp.bfloat16)  # (HW2, 9*C1)

    h2 = jnp.dot(cols2, w2_ref[...], preferred_element_type=jnp.float32)
    h2 = jnp.maximum(h2 + b2_ref[...], 0.0)                      # (HW2, C2) f32

    # ---- global average pool: cross-sublane sum (XLU), f32 epilogue -------
    feats = jnp.sum(h2, axis=0, keepdims=True) * (1.0 / hw2)     # (1, C2)

    # ---- decoder: project features BEFORE broadcasting over boxes ---------
    ctx = jnp.dot(feats.astype(jnp.bfloat16), wfp_ref[...],
                  preferred_element_type=jnp.float32) + bfp_ref[...]   # (1, D)

    h = jnp.dot(boxes_ref[...], wbe_ref[...],
                preferred_element_type=jnp.float32) + bbe_ref[...] + ctx  # (N, D)
    h = jnp.maximum(h, 0.0)

    h = jnp.dot(h.astype(jnp.bfloat16), wh_ref[...],
                preferred_element_type=jnp.float32) + bh_ref[...]
    h = jnp.maximum(h, 0.0)                                      # (N, D)

    # fused box+class heads, lane-dense 128-wide output slab
    out_ref[...] = jnp.dot(h.astype(jnp.bfloat16), whead_ref[...],
                           preferred_element_type=jnp.float32) + bhead_ref[...]


def _fused_call(cols1, boxes, params, *, batch, hw1, hw2, wo2, nbox):
    c1 = params["w1"].shape[1]
    c2 = params["w2"].shape[1]
    d = params["w_h"].shape[0]
    k1 = params["w1"].shape[0]
    k2 = params["w2"].shape[0]
    m = batch * nbox

    kernel = functools.partial(_diffusiondet_kernel, hw2=hw2, wo2=wo2, c1=c1)

    args = (cols1, params["w1"], params["b1"], params["w2"], params["b2"], boxes,
            params["w_fp"], params["b_fp"], params["w_be"], params["b_be"],
            params["w_h"], params["b_h"], params["w_head"], params["b_head"])

    def _wspec(a):
        nd = a.ndim
        return pl.BlockSpec(a.shape, lambda b: (0,) * nd)       # same block every step

    in_specs = [
        pl.BlockSpec((hw1, 9 * CIN_P), lambda b: (b, 0)),        # cols1: per-image rows
        _wspec(params["w1"]), _wspec(params["b1"]),
        _wspec(params["w2"]), _wspec(params["b2"]),
        pl.BlockSpec((nbox, 8), lambda b: (b, 0)),               # boxes: per-image rows
        _wspec(params["w_fp"]), _wspec(params["b_fp"]),
        _wspec(params["w_be"]), _wspec(params["b_be"]),
        _wspec(params["w_h"]), _wspec(params["b_h"]),
        _wspec(params["w_head"]), _wspec(params["b_head"]),
    ]

    flops = 2 * batch * (hw1 * k1 * c1 + hw2 * k2 * c2 + c2 * d) \
        + 2 * m * (8 * d + d * d + d * HEAD_N)
    bytes_accessed = sum(int(a.size) * a.dtype.itemsize for a in args) \
        + m * HEAD_N * 4

    return pl.pallas_call(
        kernel,
        out_shape=jax.ShapeDtypeStruct((m, HEAD_N), jnp.float32),
        grid=(batch,),
        in_specs=in_specs,
        out_specs=pl.BlockSpec((nbox, HEAD_N), lambda b: (b, 0)),
        compiler_params=pltpu.CompilerParams(
            dimension_semantics=("parallel",),
            vmem_limit_bytes=32 * 1024 * 1024),
        cost_estimate=pl.CostEstimate(
            flops=flops, transcendentals=0, bytes_accessed=bytes_accessed),
    )(*args)


# ----------------------------------------------------------------------------
# Parameter init (deterministic, synthetic) -- all layout work hoisted here
# ----------------------------------------------------------------------------
def init_params(num_classes=3, enc_c1=8, enc_c2=16, hidden=32, image_hw=(16, 16)):
    del image_hw  # geometry no longer baked into params (no gather matrices)
    key = jax.random.PRNGKey(0)
    ks = jax.random.split(key, 12)

    # Raw PyTorch-layout weights (same RNG stream as the reference implementation).
    conv1_w = 0.1 * jax.random.normal(ks[0], (enc_c1, CIN, 3, 3), jnp.float32)
    conv1_b = jnp.zeros((enc_c1,), jnp.float32)
    conv2_w = 0.1 * jax.random.normal(ks[1], (enc_c2, enc_c1, 3, 3), jnp.float32)
    conv2_b = jnp.zeros((enc_c2,), jnp.float32)
    box_embed_w = 0.1 * jax.random.normal(ks[2], (4, hidden), jnp.float32)
    box_embed_b = jnp.zeros((hidden,), jnp.float32)
    feat_proj_w = 0.1 * jax.random.normal(ks[3], (enc_c2, hidden), jnp.float32)
    feat_proj_b = jnp.zeros((hidden,), jnp.float32)
    hidden_w = 0.1 * jax.random.normal(ks[4], (hidden, hidden), jnp.float32)
    hidden_b = jnp.zeros((hidden,), jnp.float32)
    box_head_w = 0.1 * jax.random.normal(ks[5], (hidden, 4), jnp.float32)
    box_head_b = jnp.zeros((4,), jnp.float32)
    cls_head_w = 0.1 * jax.random.normal(ks[6], (hidden, num_classes), jnp.float32)
    cls_head_b = jnp.zeros((num_classes,), jnp.float32)

    p = {}
    # conv1: (kh,kw,Cin,Cout) with Cin zero-padded 3->8 => K = 9*8 = 72 (mult of 8)
    w1 = jnp.transpose(conv1_w, (2, 3, 1, 0))                       # (3,3,3,C1)
    w1 = jnp.pad(w1, ((0, 0), (0, 0), (0, CIN_P - CIN), (0, 0)))    # (3,3,8,C1)
    p["w1"] = w1.reshape(9 * CIN_P, enc_c1).astype(jnp.bfloat16)
    p["b1"] = conv1_b.reshape(1, enc_c1)

    # conv2: single (9*C1, C2) weight, taps ordered (dy, dx) row-major, channels inner
    w2 = jnp.transpose(conv2_w, (2, 3, 1, 0))                       # (3,3,C1,C2)
    p["w2"] = w2.reshape(9 * enc_c1, enc_c2).astype(jnp.bfloat16)
    p["b2"] = conv2_b.reshape(1, enc_c2)

    # decoder (box K padded 4->8; heads fused + lane-dense padded to 128)
    p["w_be"] = jnp.pad(box_embed_w, ((0, 4), (0, 0))).astype(jnp.bfloat16)   # (8, D)
    p["b_be"] = box_embed_b.reshape(1, hidden)
    p["w_fp"] = feat_proj_w.astype(jnp.bfloat16)                              # (C2, D)
    p["b_fp"] = feat_proj_b.reshape(1, hidden)
    p["w_h"] = hidden_w.astype(jnp.bfloat16)                                  # (D, D)
    p["b_h"] = hidden_b.reshape(1, hidden)
    w_head = jnp.concatenate([box_head_w, cls_head_w], axis=1)                # (D, 4+K)
    p["w_head"] = jnp.pad(w_head, ((0, 0), (0, HEAD_N - 4 - num_classes))).astype(jnp.bfloat16)
    b_head = jnp.concatenate([box_head_b, cls_head_b])
    p["b_head"] = jnp.pad(b_head, (0, HEAD_N - 4 - num_classes)).reshape(1, HEAD_N)
    return p


# ----------------------------------------------------------------------------
# Glue: conv1 im2col + parity reorder (pure layout; all math runs in the kernel)
# ----------------------------------------------------------------------------
def _im2col_s2(x_nhwc):
    """3x3 / stride-2 / pad-1 im2col. Returns (B, Ho, Wo, 9*C)."""
    b, h, w, c = x_nhwc.shape
    ho, wo = _conv_geom(h, w)
    xp = jnp.pad(x_nhwc, ((0, 0), (1, 1), (1, 1), (0, 0)))
    taps = [xp[:, dy:dy + 2 * ho:2, dx:dx + 2 * wo:2, :]
            for dy in range(3) for dx in range(3)]
    cols = jnp.stack(taps, axis=-2)                       # (B, Ho, Wo, 9, C)
    return cols.reshape(b, ho, wo, 9 * c), ho, wo


def _parity_reorder(cols, ho1, wo1):
    """Reorder conv1-patch rows into 4 (row-parity, col-parity) blocks per image."""
    b = cols.shape[0]
    k = cols.shape[-1]
    ho2, wo2 = ho1 // 2, wo1 // 2
    c6 = cols.reshape(b, ho2, 2, wo2, 2, k)               # (B, oy, pr, ox, pc, K)
    c6 = jnp.transpose(c6, (0, 2, 4, 1, 3, 5))            # (B, pr, pc, oy, ox, K)
    return c6.reshape(b * ho1 * wo1, k)


# ----------------------------------------------------------------------------
# Forward pass (DiffusionDet.forward): exactly ONE pallas_call
# ----------------------------------------------------------------------------
def diffusiondet_forward(params, images_nchw, noisy_boxes, num_classes=3):
    """
    Args:
        images_nchw: (B, 3, H, W) float32
        noisy_boxes: (B, N, 4)    float32
    Returns:
        pred_boxes:  (B, N, 4)
        pred_logits: (B, N, num_classes)
    """
    b, cin, h, w = images_nchw.shape
    _, nbox, _ = noisy_boxes.shape

    x = jnp.transpose(images_nchw, (0, 2, 3, 1))                          # NCHW -> NHWC
    x = jnp.pad(x, ((0, 0), (0, 0), (0, 0), (0, CIN_P - cin)))            # C: 3 -> 8
    cols1, ho1, wo1 = _im2col_s2(x)                                       # (B,Ho1,Wo1,72)
    assert ho1 % 2 == 0 and wo1 % 2 == 0, "parity im2col needs even conv1 output dims"
    ho2, wo2 = _conv_geom(ho1, wo1)
    cols1 = _parity_reorder(cols1, ho1, wo1).astype(jnp.bfloat16)         # (B*HW1, 72)

    boxes_flat = jnp.pad(noisy_boxes.reshape(b * nbox, 4),
                         ((0, 0), (0, 4))).astype(jnp.bfloat16)           # K: 4 -> 8

    out = _fused_call(cols1, boxes_flat, params, batch=b,
                      hw1=ho1 * wo1, hw2=ho2 * wo2, wo2=wo2, nbox=nbox)   # (B*N, 128)
    pred_boxes = out[:, :4].reshape(b, nbox, 4)
    pred_logits = out[:, 4:4 + num_classes].reshape(b, nbox, num_classes)
    return pred_boxes, pred_logits


# ----------------------------------------------------------------------------
if __name__ == "__main__":
    B, H, W = 2, 16, 16
    Nbox = 8
    num_classes = 3

    key = jax.random.PRNGKey(0)
    k_img, k_box = jax.random.split(key)
    images = jax.random.normal(k_img, (B, 3, H, W), jnp.float32)       # NCHW
    noisy_boxes = jax.random.uniform(k_box, (B, Nbox, 4), jnp.float32)

    params = init_params(num_classes=num_classes, image_hw=(H, W))

    fwd = jax.jit(functools.partial(diffusiondet_forward, num_classes=num_classes))
    pred_boxes, pred_logits = fwd(params, images, noisy_boxes)
    jax.block_until_ready((pred_boxes, pred_logits))

    assert pred_boxes.shape == (B, Nbox, 4)
    assert pred_logits.shape == (B, Nbox, num_classes)
    assert bool(jnp.all(jnp.isfinite(pred_boxes))) and bool(jnp.all(jnp.isfinite(pred_logits)))
    print("KERNEL_OK")
</pallas_src>

<mosaic_0001>
module attributes {stable_mosaic.version = 11 : i64} {
  func.func @_diffusiondet_kernel(%arg0: i32, %arg1: memref<64x72xbf16, #tpu.memory_space<vmem>>, %arg2: memref<72x8xbf16, #tpu.memory_space<vmem>>, %arg3: memref<1x8xf32, #tpu.memory_space<vmem>>, %arg4: memref<72x16xbf16, #tpu.memory_space<vmem>>, %arg5: memref<1x16xf32, #tpu.memory_space<vmem>>, %arg6: memref<8x8xbf16, #tpu.memory_space<vmem>>, %arg7: memref<16x32xbf16, #tpu.memory_space<vmem>>, %arg8: memref<1x32xf32, #tpu.memory_space<vmem>>, %arg9: memref<8x32xbf16, #tpu.memory_space<vmem>>, %arg10: memref<1x32xf32, #tpu.memory_space<vmem>>, %arg11: memref<32x32xbf16, #tpu.memory_space<vmem>>, %arg12: memref<1x32xf32, #tpu.memory_space<vmem>>, %arg13: memref<32x128xbf16, #tpu.memory_space<vmem>>, %arg14: memref<1x128xf32, #tpu.memory_space<vmem>>, %arg15: memref<8x128xf32, #tpu.memory_space<vmem>>) attributes {dimension_semantics = [#tpu.dimension_semantics<parallel>], iteration_bounds = array<i64: 2>, scalar_prefetch = 0 : i64, scratch_operands = 0 : i64, tpu.core_type = #tpu.core_type<tc>, window_params = [{transform_indices = @transform_0, window_bounds = array<i64: 64, 72>}, {pipeline_mode = #tpu.pipeline_mode<synchronous>, transform_indices = @transform_1, window_bounds = array<i64: 72, 8>}, {pipeline_mode = #tpu.pipeline_mode<synchronous>, transform_indices = @transform_2, window_bounds = array<i64: 1, 8>}, {pipeline_mode = #tpu.pipeline_mode<synchronous>, transform_indices = @transform_3, window_bounds = array<i64: 72, 16>}, {pipeline_mode = #tpu.pipeline_mode<synchronous>, transform_indices = @transform_4, window_bounds = array<i64: 1, 16>}, {transform_indices = @transform_5, window_bounds = array<i64: 8, 8>}, {pipeline_mode = #tpu.pipeline_mode<synchronous>, transform_indices = @transform_6, window_bounds = array<i64: 16, 32>}, {pipeline_mode = #tpu.pipeline_mode<synchronous>, transform_indices = @transform_7, window_bounds = array<i64: 1, 32>}, {pipeline_mode = #tpu.pipeline_mode<synchronous>, transform_indices = @transform_8, window_bounds = array<i64: 8, 32>}, {pipeline_mode = #tpu.pipeline_mode<synchronous>, transform_indices = @transform_9, window_bounds = array<i64: 1, 32>}, {pipeline_mode = #tpu.pipeline_mode<synchronous>, transform_indices = @transform_10, window_bounds = array<i64: 32, 32>}, {pipeline_mode = #tpu.pipeline_mode<synchronous>, transform_indices = @transform_11, window_bounds = array<i64: 1, 32>}, {pipeline_mode = #tpu.pipeline_mode<synchronous>, transform_indices = @transform_12, window_bounds = array<i64: 32, 128>}, {pipeline_mode = #tpu.pipeline_mode<synchronous>, transform_indices = @transform_13, window_bounds = array<i64: 1, 128>}, {transform_indices = @transform_14, window_bounds = array<i64: 8, 128>}]} {
    %c0 = arith.constant 0 : index
    %c0_0 = arith.constant 0 : index
    %0 = vector.load %arg1[%c0, %c0_0] : memref<64x72xbf16, #tpu.memory_space<vmem>>, vector<64x72xbf16>
    %c0_1 = arith.constant 0 : index
    %c0_2 = arith.constant 0 : index
    %1 = vector.load %arg2[%c0_1, %c0_2] : memref<72x8xbf16, #tpu.memory_space<vmem>>, vector<72x8xbf16>
    %cst = arith.constant dense<0.000000e+00> : vector<64x8xf32>
    %2 = tpu.matmul %0, %1, %cst {dimension_numbers = #tpu.dot_dimension_numbers<[1], [0], [0], [1], [0, 0, 1, 1], [], []>} : vector<64x72xbf16>, vector<72x8xbf16>, vector<64x8xf32> -> vector<64x8xf32>
    %c0_3 = arith.constant 0 : index
    %c0_4 = arith.constant 0 : index
    %3 = vector.load %arg3[%c0_3, %c0_4] : memref<1x8xf32, #tpu.memory_space<vmem>>, vector<1x8xf32>
    %4 = vector.broadcast %3 : vector<1x8xf32> to vector<64x8xf32>
    %5 = arith.addf %2, %4 : vector<64x8xf32>
    %cst_5 = arith.constant 0.000000e+00 : f32
    %6 = vector.broadcast %cst_5 : f32 to vector<64x8xf32>
    %7 = arith.maximumf %5, %6 : vector<64x8xf32>
    %8 = vector.extract_strided_slice %7 {offsets = [0, 0], sizes = [16, 8], strides = [1, 1]} : vector<64x8xf32> to vector<16x8xf32>
    %9 = vector.extract_strided_slice %7 {offsets = [16, 0], sizes = [16, 8], strides = [1, 1]} : vector<64x8xf32> to vector<16x8xf32>
    %10 = vector.extract_strided_slice %7 {offsets = [32, 0], sizes = [16, 8], strides = [1, 1]} : vector<64x8xf32> to vector<16x8xf32>
    %11 = vector.extract_strided_slice %7 {offsets = [48, 0], sizes = [16, 8], strides = [1, 1]} : vector<64x8xf32> to vector<16x8xf32>
    %12 = tpu.iota {dimensions = array<i32: 0>} : vector<16x8xi32>
    %c4_i32 = arith.constant 4 : i32
    %c0_i32 = arith.constant 0 : i32
    %13 = arith.cmpi eq, %c4_i32, %c0_i32 : i32
    %c1_i32 = arith.constant 1 : i32
    %14 = arith.select %13, %c1_i32, %c4_i32 : i32
    %15 = vector.broadcast %14 : i32 to vector<16x8xi32>
    %16 = arith.remsi %12, %15 : vector<16x8xi32>
    %c0_i32_6 = arith.constant 0 : i32
    %17 = vector.broadcast %c0_i32_6 : i32 to vector<16x8xi32>
    %18 = arith.cmpi ne, %16, %17 : vector<16x8xi32>
    %c0_i32_7 = arith.constant 0 : i32
    %19 = vector.broadcast %c0_i32_7 : i32 to vector<16x8xi32>
    %20 = arith.cmpi slt, %16, %19 : vector<16x8xi32>
    %c0_i32_8 = arith.constant 0 : i32
    %21 = arith.cmpi slt, %14, %c0_i32_8 : i32
    %22 = vector.broadcast %21 : i1 to vector<16x8xi1>
    %23 = vector.broadcast %22 : vector<16x8xi1> to vector<16x8xi1>
    %24 = arith.xori %20, %23 : vector<16x8xi1>
    %25 = arith.andi %24, %18 : vector<16x8xi1>
    %26 = vector.broadcast %14 : i32 to vector<16x8xi32>
    %27 = arith.addi %16, %26 : vector<16x8xi32>
    %28 = arith.select %25, %27, %16 : vector<16x8xi1>, vector<16x8xi32>
    %c0_i32_9 = arith.constant 0 : i32
    %29 = vector.broadcast %c0_i32_9 : i32 to vector<16x8xi32>
    %30 = arith.cmpi eq, %28, %29 : vector<16x8xi32>
    %cst_10 = arith.constant 0.000000e+00 : f32
    %31 = vector.broadcast %cst_10 : f32 to vector<5x8xf32>
    %32 = vector.extract_strided_slice %11 {offsets = [0, 0], sizes = [11, 8], strides = [1, 1]} : vector<16x8xf32> to vector<11x8xf32>
    %33 = tpu.concatenate %31, %32 in 0 : vector<5x8xf32>, vector<11x8xf32> -> vector<16x8xf32>
    %cst_11 = arith.constant 0.000000e+00 : f32
    %34 = vector.broadcast %cst_11 : f32 to vector<16x8xf32>
    %35 = arith.select %30, %34, %33 : vector<16x8xi1>, vector<16x8xf32>
    %cst_12 = arith.constant 0.000000e+00 : f32
    %36 = vector.broadcast %cst_12 : f32 to vector<4x8xf32>
    %37 = vector.extract_strided_slice %10 {offsets = [0, 0], sizes = [12, 8], strides = [1, 1]} : vector<16x8xf32> to vector<12x8xf32>
    %38 = tpu.concatenate %36, %37 in 0 : vector<4x8xf32>, vector<12x8xf32> -> vector<16x8xf32>
    %cst_13 = arith.constant 0.000000e+00 : f32
    %39 = vector.broadcast %cst_13 : f32 to vector<4x8xf32>
    %40 = vector.extract_strided_slice %11 {offsets = [0, 0], sizes = [12, 8], strides = [1, 1]} : vector<16x8xf32> to vector<12x8xf32>
    %41 = tpu.concatenate %39, %40 in 0 : vector<4x8xf32>, vector<12x8xf32> -> vector<16x8xf32>
    %cst_14 = arith.constant 0.000000e+00 : f32
    %42 = vector.broadcast %cst_14 : f32 to vector<1x8xf32>
    %43 = vector.extract_strided_slice %9 {offsets = [0, 0], sizes = [15, 8], strides = [1, 1]} : vector<16x8xf32> to vector<15x8xf32>
    %44 = tpu.concatenate %42, %43 in 0 : vector<1x8xf32>, vector<15x8xf32> -> vector<16x8xf32>
    %cst_15 = arith.constant 0.000000e+00 : f32
    %45 = vector.broadcast %cst_15 : f32 to vector<16x8xf32>
    %46 = arith.select %30, %45, %44 : vector<16x8xi1>, vector<16x8xf32>
    %cst_16 = arith.constant 0.000000e+00 : f32
    %47 = vector.broadcast %cst_16 : f32 to vector<1x8xf32>
    %48 = vector.extract_strided_slice %11 {offsets = [0, 0], sizes = [15, 8], strides = [1, 1]} : vector<16x8xf32> to vector<15x8xf32>
    %49 = tpu.concatenate %47, %48 in 0 : vector<1x8xf32>, vector<15x8xf32> -> vector<16x8xf32>
    %cst_17 = arith.constant 0.000000e+00 : f32
    %50 = vector.broadcast %cst_17 : f32 to vector<16x8xf32>
    %51 = arith.select %30, %50, %49 : vector<16x8xi1>, vector<16x8xf32>
    %52 = tpu.concatenate %35, %38, %41, %46, %8, %9, %51, %10, %11 in 1 : vector<16x8xf32>, vector<16x8xf32>, vector<16x8xf32>, vector<16x8xf32>, vector<16x8xf32>, vector<16x8xf32>, vector<16x8xf32>, vector<16x8xf32>, vector<16x8xf32> -> vector<16x72xf32>
    %53 = arith.truncf %52 : vector<16x72xf32> to vector<16x72xbf16>
    %c0_18 = arith.constant 0 : index
    %c0_19 = arith.constant 0 : index
    %54 = vector.load %arg4[%c0_18, %c0_19] : memref<72x16xbf16, #tpu.memory_space<vmem>>, vector<72x16xbf16>
    %cst_20 = arith.constant dense<0.000000e+00> : vector<16x16xf32>
    %55 = tpu.matmul %53, %54, %cst_20 {dimension_numbers = #tpu.dot_dimension_numbers<[1], [0], [0], [1], [0, 0, 1, 1], [], []>} : vector<16x72xbf16>, vector<72x16xbf16>, vector<16x16xf32> -> vector<16x16xf32>
    %c0_21 = arith.constant 0 : index
    %c0_22 = arith.constant 0 : index
    %56 = vector.load %arg5[%c0_21, %c0_22] : memref<1x16xf32, #tpu.memory_space<vmem>>, vector<1x16xf32>
    %57 = vector.broadcast %56 : vector<1x16xf32> to vector<16x16xf32>
    %58 = arith.addf %55, %57 : vector<16x16xf32>
    %cst_23 = arith.constant 0.000000e+00 : f32
    %59 = vector.broadcast %cst_23 : f32 to vector<16x16xf32>
    %60 = arith.maximumf %58, %59 : vector<16x16xf32>
    %cst_24 = arith.constant dense<0.000000e+00> : vector<16xf32>
    %61 = vector.multi_reduction <add>, %60, %cst_24 [0] : vector<16x16xf32> to vector<16xf32>
    %62 = vector.shape_cast %61 : vector<16xf32> to vector<1x16xf32>
    %cst_25 = arith.constant 6.250000e-02 : f32
    %63 = vector.broadcast %cst_25 : f32 to vector<1x16xf32>
    %64 = arith.mulf %62, %63 : vector<1x16xf32>
    %65 = arith.truncf %64 : vector<1x16xf32> to vector<1x16xbf16>
    %c0_26 = arith.constant 0 : index
    %c0_27 = arith.constant 0 : index
    %66 = vector.load %arg7[%c0_26, %c0_27] : memref<16x32xbf16, #tpu.memory_space<vmem>>, vector<16x32xbf16>
    %cst_28 = arith.constant dense<0.000000e+00> : vector<1x32xf32>
    %67 = tpu.matmul %65, %66, %cst_28 {dimension_numbers = #tpu.dot_dimension_numbers<[1], [0], [0], [1], [0, 0, 1, 1], [], []>} : vector<1x16xbf16>, vector<16x32xbf16>, vector<1x32xf32> -> vector<1x32xf32>
    %c0_29 = arith.constant 0 : index
    %c0_30 = arith.constant 0 : index
    %68 = vector.load %arg8[%c0_29, %c0_30] : memref<1x32xf32, #tpu.memory_space<vmem>>, vector<1x32xf32>
    %69 = arith.addf %67, %68 : vector<1x32xf32>
    %c0_31 = arith.constant 0 : index
    %c0_32 = arith.constant 0 : index
    %70 = vector.load %arg6[%c0_31, %c0_32] : memref<8x8xbf16, #tpu.memory_space<vmem>>, vector<8x8xbf16>
    %c0_33 = arith.constant 0 : index
    %c0_34 = arith.constant 0 : index
    %71 = vector.load %arg9[%c0_33, %c0_34] : memref<8x32xbf16, #tpu.memory_space<vmem>>, vector<8x32xbf16>
    %cst_35 = arith.constant dense<0.000000e+00> : vector<8x32xf32>
    %72 = tpu.matmul %70, %71, %cst_35 {dimension_numbers = #tpu.dot_dimension_numbers<[1], [0], [0], [1], [0, 0, 1, 1], [], []>} : vector<8x8xbf16>, vector<8x32xbf16>, vector<8x32xf32> -> vector<8x32xf32>
    %c0_36 = arith.constant 0 : index
    %c0_37 = arith.constant 0 : index
    %73 = vector.load %arg10[%c0_36, %c0_37] : memref<1x32xf32, #tpu.memory_space<vmem>>, vector<1x32xf32>
    %74 = vector.broadcast %73 : vector<1x32xf32> to vector<8x32xf32>
    %75 = arith.addf %72, %74 : vector<8x32xf32>
    %76 = vector.broadcast %69 : vector<1x32xf32> to vector<8x32xf32>
    %77 = arith.addf %75, %76 : vector<8x32xf32>
    %cst_38 = arith.constant 0.000000e+00 : f32
    %78 = vector.broadcast %cst_38 : f32 to vector<8x32xf32>
    %79 = arith.maximumf %77, %78 : vector<8x32xf32>
    %80 = arith.truncf %79 : vector<8x32xf32> to vector<8x32xbf16>
    %c0_39 = arith.constant 0 : index
    %c0_40 = arith.constant 0 : index
    %81 = vector.load %arg11[%c0_39, %c0_40] : memref<32x32xbf16, #tpu.memory_space<vmem>>, vector<32x32xbf16>
    %cst_41 = arith.constant dense<0.000000e+00> : vector<8x32xf32>
    %82 = tpu.matmul %80, %81, %cst_41 {dimension_numbers = #tpu.dot_dimension_numbers<[1], [0], [0], [1], [0, 0, 1, 1], [], []>} : vector<8x32xbf16>, vector<32x32xbf16>, vector<8x32xf32> -> vector<8x32xf32>
    %c0_42 = arith.constant 0 : index
    %c0_43 = arith.constant 0 : index
    %83 = vector.load %arg12[%c0_42, %c0_43] : memref<1x32xf32, #tpu.memory_space<vmem>>, vector<1x32xf32>
    %84 = vector.broadcast %83 : vector<1x32xf32> to vector<8x32xf32>
    %85 = arith.addf %82, %84 : vector<8x32xf32>
    %cst_44 = arith.constant 0.000000e+00 : f32
    %86 = vector.broadcast %cst_44 : f32 to vector<8x32xf32>
    %87 = arith.maximumf %85, %86 : vector<8x32xf32>
    %88 = arith.truncf %87 : vector<8x32xf32> to vector<8x32xbf16>
    %c0_45 = arith.constant 0 : index
    %c0_46 = arith.constant 0 : index
    %89 = vector.load %arg13[%c0_45, %c0_46] : memref<32x128xbf16, #tpu.memory_space<vmem>>, vector<32x128xbf16>
    %cst_47 = arith.constant dense<0.000000e+00> : vector<8x128xf32>
    %90 = tpu.matmul %88, %89, %cst_47 {dimension_numbers = #tpu.dot_dimension_numbers<[1], [0], [0], [1], [0, 0, 1, 1], [], []>} : vector<8x32xbf16>, vector<32x128xbf16>, vector<8x128xf32> -> vector<8x128xf32>
    %c0_48 = arith.constant 0 : index
    %c0_49 = arith.constant 0 : index
    %91 = vector.load %arg14[%c0_48, %c0_49] : memref<1x128xf32, #tpu.memory_space<vmem>>, vector<1x128xf32>
    %92 = vector.broadcast %91 : vector<1x128xf32> to vector<8x128xf32>
    %93 = arith.addf %90, %92 : vector<8x128xf32>
    %c0_50 = arith.constant 0 : index
    %c0_51 = arith.constant 0 : index
    %94 = vector.load %arg15[%c0_50, %c0_51] : memref<8x128xf32, #tpu.memory_space<vmem>>, vector<8x128xf32>
    tpu.vector_store %arg15[%c0_50, %c0_51], %93 {strides = array<i32>} : memref<8x128xf32, #tpu.memory_space<vmem>>, vector<8x128xf32>,
    return
  }
  func.func @transform_0(%arg0: i32) -> (i32, i32) {
    %c0_i32 = arith.constant 0 : i32
    %c0_i32_0 = arith.constant 0 : i32
    return %arg0, %c0_i32 : i32, i32
  }
  func.func @transform_1(%arg0: i32) -> (i32, i32) {
    %c0_i32 = arith.constant 0 : i32
    %c0_i32_0 = arith.constant 0 : i32
    %c0_i32_1 = arith.constant 0 : i32
    return %c0_i32, %c0_i32_0 : i32, i32
  }
  func.func @transform_2(%arg0: i32) -> (i32, i32) {
    %c0_i32 = arith.constant 0 : i32
    %c0_i32_0 = arith.constant 0 : i32
    %c0_i32_1 = arith.constant 0 : i32
    return %c0_i32, %c0_i32_0 : i32, i32
  }
  func.func @transform_3(%arg0: i32) -> (i32, i32) {
    %c0_i32 = arith.constant 0 : i32
    %c0_i32_0 = arith.constant 0 : i32
    %c0_i32_1 = arith.constant 0 : i32
    return %c0_i32, %c0_i32_0 : i32, i32
  }
  func.func @transform_4(%arg0: i32) -> (i32, i32) {
    %c0_i32 = arith.constant 0 : i32
    %c0_i32_0 = arith.constant 0 : i32
    %c0_i32_1 = arith.constant 0 : i32
    return %c0_i32, %c0_i32_0 : i32, i32
  }
  func.func @transform_5(%arg0: i32) -> (i32, i32) {
    %c0_i32 = arith.constant 0 : i32
    %c0_i32_0 = arith.constant 0 : i32
    return %arg0, %c0_i32 : i32, i32
  }
  func.func @transform_6(%arg0: i32) -> (i32, i32) {
    %c0_i32 = arith.constant 0 : i32
    %c0_i32_0 = arith.constant 0 : i32
    %c0_i32_1 = arith.constant 0 : i32
    return %c0_i32, %c0_i32_0 : i32, i32
  }
  func.func @transform_7(%arg0: i32) -> (i32, i32) {
    %c0_i32 = arith.constant 0 : i32
    %c0_i32_0 = arith.constant 0 : i32
    %c0_i32_1 = arith.constant 0 : i32
    return %c0_i32, %c0_i32_0 : i32, i32
  }
  func.func @transform_8(%arg0: i32) -> (i32, i32) {
    %c0_i32 = arith.constant 0 : i32
    %c0_i32_0 = arith.constant 0 : i32
    %c0_i32_1 = arith.constant 0 : i32
    return %c0_i32, %c0_i32_0 : i32, i32
  }
  func.func @transform_9(%arg0: i32) -> (i32, i32) {
    %c0_i32 = arith.constant 0 : i32
    %c0_i32_0 = arith.constant 0 : i32
    %c0_i32_1 = arith.constant 0 : i32
    return %c0_i32, %c0_i32_0 : i32, i32
  }
  func.func @transform_10(%arg0: i32) -> (i32, i32) {
    %c0_i32 = arith.constant 0 : i32
    %c0_i32_0 = arith.constant 0 : i32
    %c0_i32_1 = arith.constant 0 : i32
    return %c0_i32, %c0_i32_0 : i32, i32
  }
  func.func @transform_11(%arg0: i32) -> (i32, i32) {
    %c0_i32 = arith.constant 0 : i32
    %c0_i32_0 = arith.constant 0 : i32
    %c0_i32_1 = arith.constant 0 : i32
    return %c0_i32, %c0_i32_0 : i32, i32
  }
  func.func @transform_12(%arg0: i32) -> (i32, i32) {
    %c0_i32 = arith.constant 0 : i32
    %c0_i32_0 = arith.constant 0 : i32
    %c0_i32_1 = arith.constant 0 : i32
    return %c0_i32, %c0_i32_0 : i32, i32
  }
  func.func @transform_13(%arg0: i32) -> (i32, i32) {
    %c0_i32 = arith.constant 0 : i32
    %c0_i32_0 = arith.constant 0 : i32
    %c0_i32_1 = arith.constant 0 : i32
    return %c0_i32, %c0_i32_0 : i32, i32
  }
  func.func @transform_14(%arg0: i32) -> (i32, i32) {
    %c0_i32 = arith.constant 0 : i32
    %c0_i32_0 = arith.constant 0 : i32
    return %arg0, %c0_i32 : i32, i32
  }
}

</mosaic_0001>

<llo_original>
// kernel: diffusiondet_forward.1
$region0: #{diffusiondet_forward.1}
  #allocation0 [shape = 'u32[]', space=smem, size = 0x4, offset = 0x4, fixed_abs, tag = 'smem constant byte address 0x4 - core index']
  #allocation1 [shape = 'u32[144,128]{1,0:T(1,128)}', space=vmem, size = 0x12000, scoped, tag = 'internal scratch']
  %s0 = inlined_call_operand.vmem [shape: bf16[128,72], index: 0, kind: input, shape index: {}]
  %s1 = inlined_call_operand.vmem [shape: bf16[72,8], index: 1, kind: input, shape index: {}]
  %s2 = inlined_call_operand.vmem [shape: f32[1,8], index: 2, kind: input, shape index: {}]
  %s3 = inlined_call_operand.vmem [shape: bf16[72,16], index: 3, kind: input, shape index: {}]
  %s4 = inlined_call_operand.vmem [shape: f32[1,16], index: 4, kind: input, shape index: {}]
  %s5 = inlined_call_operand.vmem [shape: bf16[16,8], index: 5, kind: input, shape index: {}]
  %s6 = inlined_call_operand.vmem [shape: bf16[16,32], index: 6, kind: input, shape index: {}]
  %s7 = inlined_call_operand.vmem [shape: f32[1,32], index: 7, kind: input, shape index: {}]
  %s8 = inlined_call_operand.vmem [shape: bf16[8,32], index: 8, kind: input, shape index: {}]
  %s9 = inlined_call_operand.vmem [shape: f32[1,32], index: 9, kind: input, shape index: {}]
  %s10 = inlined_call_operand.vmem [shape: bf16[32,32], index: 10, kind: input, shape index: {}]
  %s11 = inlined_call_operand.vmem [shape: f32[1,32], index: 11, kind: input, shape index: {}]
  %s12 = inlined_call_operand.vmem [shape: bf16[32,128], index: 12, kind: input, shape index: {}]
  %s13 = inlined_call_operand.vmem [shape: f32[1,128], index: 13, kind: input, shape index: {}]
  %s14 = inlined_call_operand.vmem [shape: f32[16,128], index: 14, kind: output, shape index: {}]
  %s15 = sld [smem:[#allocation0]]
  $region89: #{diffusiondet_forward.1} parent=0
    _
  %s17 = ssub.s32 1, %s15
  %s18 = scalar_select 0, %s17, %s15
  loop: start=0, step=1, limit=4
  $region2: #{diffusiondet_forward.1} parent=0 // loop_pre_header
    _
  $region3: #{diffusiondet_forward.1} parent=0 // loop_header
    %s20 = sphi 0, %s24
    %p21 = scmp.ge.s32.totalorder %s20, 4
    %s30 = sphi 0, %s32
    %s33 = sphi 0, %s30
    %s34 = sphi 0, %s33
    %s50 = sphi 0, %s34
    %s54 = sphi 0, %s54
    %s56 = sphi 0, %s54
    %s57 = sphi 0, %s56
    %s71 = sphi 0, %s57
    %s75 = sphi 0, %s75
    %s77 = sphi 0, %s75
    %s78 = sphi 0, %s77
    %s92 = sphi 0, %s78
    %s96 = sphi 0, %s96
    %s98 = sphi 0, %s96
    %s99 = sphi 0, %s98
    %s113 = sphi 0, %s99
    %s117 = sphi 0, %s117
    %s119 = sphi 0, %s117
    %s120 = sphi 0, %s119
    %s134 = sphi 0, %s120
    %s140 = sphi 0, %s142
    %s143 = sphi 0, %s140
    %s144 = sphi 0, %s143
    %s160 = sphi 0, %s144
    %s164 = sphi 0, %s164
    %s166 = sphi 0, %s164
    %s167 = sphi 0, %s166
    %s181 = sphi 0, %s167
    %s185 = sphi 0, %s185
    %s187 = sphi 0, %s185
    %s188 = sphi 0, %s187
    %s202 = sphi 0, %s188
    %s206 = sphi 0, %s206
    %s208 = sphi 0, %s206
    %s209 = sphi 0, %s208
    %s223 = sphi 0, %s209
    %s227 = sphi 0, %s227
    %s229 = sphi 0, %s227
    %s230 = sphi 0, %s229
    %s244 = sphi 0, %s230
    %s248 = sphi 0, %s248
    %s250 = sphi 0, %s248
    %s251 = sphi 0, %s250
    %s265 = sphi 0, %s251
    %s269 = sphi 0, %s269
    %s271 = sphi 0, %s269
    %s272 = sphi 0, %s271
    %s286 = sphi 0, %s272
    %s290 = sphi 0, %s290
    %s292 = sphi 0, %s290
    %s293 = sphi 0, %s292
    %s307 = sphi 0, %s293
    %s311 = sphi 0, %s311
    %s313 = sphi 0, %s311
    %s314 = sphi 0, %s313
    %s328 = sphi 0, %s314
    %s334 = sphi 0, %s336
    %s337 = sphi 0, %s334
    %s338 = sphi 0, %s337
    %s354 = sphi 0, %s338
  $region4: #{diffusiondet_forward.1} parent=0 // loop_header_branch
    %23 = sbr.rel (%p21) target = $region8
  $region5: #{diffusiondet_forward.1} parent=0 // loop_body
    %s25 = ssub.s32 %s20, 1
    %s26 = ssub.s32 %s20, 2
    %s27 = sadd.s32 %s20, 1
    %s28 = ssub.s32 %s20, %s27
    %p29 = scmp.eq.s32.totalorder %s28, 0
    %s31 = sadd.s32 %s30, 1
    %s32 = scalar_select %p29, %s30, %s31
    %p35 = pneg %p29
    %p36 = scmp.eq.s32.totalorder %s20, 1
    %p37 = por %p35, %p36
    %p38 = scmp.ne.s32.totalorder %s30, %s33
    %p39 = scmp.eq.s32.totalorder %s20, 0
    %p40 = por %p38, %p39
    %p41 = scmp.ne.s32.totalorder %s30, %s33
    %p42 = scmp.eq.s32.totalorder %s25, 1
    %p43 = por %p41, %p42
    %p44 = scmp.ne.s32.totalorder %s33, %s34
    %p45 = scmp.eq.s32.totalorder %s25, 0
    %p46 = por %p44, %p45
    %p47 = scmp.ne.s32.totalorder %s33, %s34
    %p48 = scmp.eq.s32.totalorder %s26, 1
    %p49 = por %p47, %p48
    %p51 = scmp.ne.s32.totalorder %s34, %s50
    %p52 = scmp.eq.s32.totalorder %s26, 0
    %p53 = por %p51, %p52
    %s55 = sadd.s32 %s54, 1
    %p58 = scmp.eq.s32.totalorder %s20, 1
    %p59 = scmp.ne.s32.totalorder %s54, %s56
    %p60 = scmp.eq.s32.totalorder %s20, 0
    %p61 = por %p59, %p60
    %p62 = scmp.ne.s32.totalorder %s54, %s56
    %p63 = scmp.eq.s32.totalorder %s25, 1
    %p64 = por %p62, %p63
    %p65 = scmp.ne.s32.totalorder %s56, %s57
    %p66 = scmp.eq.s32.totalorder %s25, 0
    %p67 = por %p65, %p66
    %p68 = scmp.ne.s32.totalorder %s56, %s57
    %p69 = scmp.eq.s32.totalorder %s26, 1
    %p70 = por %p68, %p69
    %p72 = scmp.ne.s32.totalorder %s57, %s71
    %p73 = scmp.eq.s32.totalorder %s26, 0
    %p74 = por %p72, %p73
    %s76 = sadd.s32 %s75, 1
    %p79 = scmp.eq.s32.totalorder %s20, 1
    %p80 = scmp.ne.s32.totalorder %s75, %s77
    %p81 = scmp.eq.s32.totalorder %s20, 0
    %p82 = por %p80, %p81
    %p83 = scmp.ne.s32.totalorder %s75, %s77
    %p84 = scmp.eq.s32.totalorder %s25, 1
    %p85 = por %p83, %p84
    %p86 = scmp.ne.s32.totalorder %s77, %s78
    %p87 = scmp.eq.s32.totalorder %s25, 0
    %p88 = por %p86, %p87
    %p89 = scmp.ne.s32.totalorder %s77, %s78
    %p90 = scmp.eq.s32.totalorder %s26, 1
    %p91 = por %p89, %p90
    %p93 = scmp.ne.s32.totalorder %s78, %s92
    %p94 = scmp.eq.s32.totalorder %s26, 0
    %p95 = por %p93, %p94
    %s97 = sadd.s32 %s96, 1
    %p100 = scmp.eq.s32.totalorder %s20, 1
    %p101 = scmp.ne.s32.totalorder %s96, %s98
    %p102 = scmp.eq.s32.totalorder %s20, 0
    %p103 = por %p101, %p102
    %p104 = scmp.ne.s32.totalorder %s96, %s98
    %p105 = scmp.eq.s32.totalorder %s25, 1
    %p106 = por %p104, %p105
    %p107 = scmp.ne.s32.totalorder %s98, %s99
    %p108 = scmp.eq.s32.totalorder %s25, 0
    %p109 = por %p107, %p108
    %p110 = scmp.ne.s32.totalorder %s98, %s99
    %p111 = scmp.eq.s32.totalorder %s26, 1
    %p112 = por %p110, %p111
    %p114 = scmp.ne.s32.totalorder %s99, %s113
    %p115 = scmp.eq.s32.totalorder %s26, 0
    %p116 = por %p114, %p115
    %s118 = sadd.s32 %s117, 1
    %p121 = scmp.eq.s32.totalorder %s20, 1
    %p122 = scmp.ne.s32.totalorder %s117, %s119
    %p123 = scmp.eq.s32.totalorder %s20, 0
    %p124 = por %p122, %p123
    %p125 = scmp.ne.s32.totalorder %s117, %s119
    %p126 = scmp.eq.s32.totalorder %s25, 1
    %p127 = por %p125, %p126
    %p128 = scmp.ne.s32.totalorder %s119, %s120
    %p129 = scmp.eq.s32.totalorder %s25, 0
    %p130 = por %p128, %p129
    %p131 = scmp.ne.s32.totalorder %s119, %s120
    %p132 = scmp.eq.s32.totalorder %s26, 1
    %p133 = por %p131, %p132
    %p135 = scmp.ne.s32.totalorder %s120, %s134
    %p136 = scmp.eq.s32.totalorder %s26, 0
    %p137 = por %p135, %p136
    %s138 = ssub.s32 %s20, %s27
    %p139 = scmp.eq.s32.totalorder %s138, 0
    %s141 = sadd.s32 %s140, 1
    %s142 = scalar_select %p139, %s140, %s141
    %p145 = pneg %p139
    %p146 = scmp.eq.s32.totalorder %s20, 1
    %p147 = por %p145, %p146
    %p148 = scmp.ne.s32.totalorder %s140, %s143
    %p149 = scmp.eq.s32.totalorder %s20, 0
    %p150 = por %p148, %p149
    %p151 = scmp.ne.s32.totalorder %s140, %s143
    %p152 = scmp.eq.s32.totalorder %s25, 1
    %p153 = por %p151, %p152
    %p154 = scmp.ne.s32.totalorder %s143, %s144
    %p155 = scmp.eq.s32.totalorder %s25, 0
    %p156 = por %p154, %p155
    %p157 = scmp.ne.s32.totalorder %s143, %s144
    %p158 = scmp.eq.s32.totalorder %s26, 1
    %p159 = por %p157, %p158
    %p161 = scmp.ne.s32.totalorder %s144, %s160
    %p162 = scmp.eq.s32.totalorder %s26, 0
    %p163 = por %p161, %p162
    %s165 = sadd.s32 %s164, 1
    %p168 = scmp.eq.s32.totalorder %s20, 1
    %p169 = scmp.ne.s32.totalorder %s164, %s166
    %p170 = scmp.eq.s32.totalorder %s20, 0
    %p171 = por %p169, %p170
    %p172 = scmp.ne.s32.totalorder %s164, %s166
    %p173 = scmp.eq.s32.totalorder %s25, 1
    %p174 = por %p172, %p173
    %p175 = scmp.ne.s32.totalorder %s166, %s167
    %p176 = scmp.eq.s32.totalorder %s25, 0
    %p177 = por %p175, %p176
    %p178 = scmp.ne.s32.totalorder %s166, %s167
    %p179 = scmp.eq.s32.totalorder %s26, 1
    %p180 = por %p178, %p179
    %p182 = scmp.ne.s32.totalorder %s167, %s181
    %p183 = scmp.eq.s32.totalorder %s26, 0
    %p184 = por %p182, %p183
    %s186 = sadd.s32 %s185, 1
    %p189 = scmp.eq.s32.totalorder %s20, 1
    %p190 = scmp.ne.s32.totalorder %s185, %s187
    %p191 = scmp.eq.s32.totalorder %s20, 0
    %p192 = por %p190, %p191
    %p193 = scmp.ne.s32.totalorder %s185, %s187
    %p194 = scmp.eq.s32.totalorder %s25, 1
    %p195 = por %p193, %p194
    %p196 = scmp.ne.s32.totalorder %s187, %s188
    %p197 = scmp.eq.s32.totalorder %s25, 0
    %p198 = por %p196, %p197
    %p199 = scmp.ne.s32.totalorder %s187, %s188
    %p200 = scmp.eq.s32.totalorder %s26, 1
    %p201 = por %p199, %p200
    %p203 = scmp.ne.s32.totalorder %s188, %s202
    %p204 = scmp.eq.s32.totalorder %s26, 0
    %p205 = por %p203, %p204
    %s207 = sadd.s32 %s206, 1
    %p210 = scmp.eq.s32.totalorder %s20, 1
    %p211 = scmp.ne.s32.totalorder %s206, %s208
    %p212 = scmp.eq.s32.totalorder %s20, 0
    %p213 = por %p211, %p212
    %p214 = scmp.ne.s32.totalorder %s206, %s208
    %p215 = scmp.eq.s32.totalorder %s25, 1
    %p216 = por %p214, %p215
    %p217 = scmp.ne.s32.totalorder %s208, %s209
    %p218 = scmp.eq.s32.totalorder %s25, 0
    %p219 = por %p217, %p218
    %p220 = scmp.ne.s32.totalorder %s208, %s209
    %p221 = scmp.eq.s32.totalorder %s26, 1
    %p222 = por %p220, %p221
    %p224 = scmp.ne.s32.totalorder %s209, %s223
    %p225 = scmp.eq.s32.totalorder %s26, 0
    %p226 = por %p224, %p225
    %s228 = sadd.s32 %s227, 1
    %p231 = scmp.eq.s32.totalorder %s20, 1
    %p232 = scmp.ne.s32.totalorder %s227, %s229
    %p233 = scmp.eq.s32.totalorder %s20, 0
    %p234 = por %p232, %p233
    %p235 = scmp.ne.s32.totalorder %s227, %s229
    %p236 = scmp.eq.s32.totalorder %s25, 1
    %p237 = por %p235, %p236
    %p238 = scmp.ne.s32.totalorder %s229, %s230
    %p239 = scmp.eq.s32.totalorder %s25, 0
    %p240 = por %p238, %p239
    %p241 = scmp.ne.s32.totalorder %s229, %s230
    %p242 = scmp.eq.s32.totalorder %s26, 1
    %p243 = por %p241, %p242
    %p245 = scmp.ne.s32.totalorder %s230, %s244
    %p246 = scmp.eq.s32.totalorder %s26, 0
    %p247 = por %p245, %p246
    %s249 = sadd.s32 %s248, 1
    %p252 = scmp.eq.s32.totalorder %s20, 1
    %p253 = scmp.ne.s32.totalorder %s248, %s250
    %p254 = scmp.eq.s32.totalorder %s20, 0
    %p255 = por %p253, %p254
    %p256 = scmp.ne.s32.totalorder %s248, %s250
    %p257 = scmp.eq.s32.totalorder %s25, 1
    %p258 = por %p256, %p257
    %p259 = scmp.ne.s32.totalorder %s250, %s251
    %p260 = scmp.eq.s32.totalorder %s25, 0
    %p261 = por %p259, %p260
    %p262 = scmp.ne.s32.totalorder %s250, %s251
    %p263 = scmp.eq.s32.totalorder %s26, 1
    %p264 = por %p262, %p263
    %p266 = scmp.ne.s32.totalorder %s251, %s265
    %p267 = scmp.eq.s32.totalorder %s26, 0
    %p268 = por %p266, %p267
    %s270 = sadd.s32 %s269, 1
    %p273 = scmp.eq.s32.totalorder %s20, 1
    %p274 = scmp.ne.s32.totalorder %s269, %s271
    %p275 = scmp.eq.s32.totalorder %s20, 0
    %p276 = por %p274, %p275
    %p277 = scmp.ne.s32.totalorder %s269, %s271
    %p278 = scmp.eq.s32.totalorder %s25, 1
    %p279 = por %p277, %p278
    %p280 = scmp.ne.s32.totalorder %s271, %s272
    %p281 = scmp.eq.s32.totalorder %s25, 0
    %p282 = por %p280, %p281
    %p283 = scmp.ne.s32.totalorder %s271, %s272
    %p284 = scmp.eq.s32.totalorder %s26, 1
    %p285 = por %p283, %p284
    %p287 = scmp.ne.s32.totalorder %s272, %s286
    %p288 = scmp.eq.s32.totalorder %s26, 0
    %p289 = por %p287, %p288
    %s291 = sadd.s32 %s290, 1
    %p294 = scmp.eq.s32.totalorder %s20, 1
    %p295 = scmp.ne.s32.totalorder %s290, %s292
    %p296 = scmp.eq.s32.totalorder %s20, 0
    %p297 = por %p295, %p296
    %p298 = scmp.ne.s32.totalorder %s290, %s292
    %p299 = scmp.eq.s32.totalorder %s25, 1
    %p300 = por %p298, %p299
    %p301 = scmp.ne.s32.totalorder %s292, %s293
    %p302 = scmp.eq.s32.totalorder %s25, 0
    %p303 = por %p301, %p302
    %p304 = scmp.ne.s32.totalorder %s292, %s293
    %p305 = scmp.eq.s32.totalorder %s26, 1
    %p306 = por %p304, %p305
    %p308 = scmp.ne.s32.totalorder %s293, %s307
    %p309 = scmp.eq.s32.totalorder %s26, 0
    %p310 = por %p308, %p309
    %s312 = sadd.s32 %s311, 1
    %p315 = scmp.eq.s32.totalorder %s20, 1
    %p316 = scmp.ne.s32.totalorder %s311, %s313
    %p317 = scmp.eq.s32.totalorder %s20, 0
    %p318 = por %p316, %p317
    %p319 = scmp.ne.s32.totalorder %s311, %s313
    %p320 = scmp.eq.s32.totalorder %s25, 1
    %p321 = por %p319, %p320
    %p322 = scmp.ne.s32.totalorder %s313, %s314
    %p323 = scmp.eq.s32.totalorder %s25, 0
    %p324 = por %p322, %p323
    %p325 = scmp.ne.s32.totalorder %s313, %s314
    %p326 = scmp.eq.s32.totalorder %s26, 1
    %p327 = por %p325, %p326
    %p329 = scmp.ne.s32.totalorder %s314, %s328
    %p330 = scmp.eq.s32.totalorder %s26, 0
    %p331 = por %p329, %p330
    %s332 = ssub.s32 %s20, %s27
    %p333 = scmp.eq.s32.totalorder %s332, 0
    %s335 = sadd.s32 %s334, 1
    %s336 = scalar_select %p333, %s334, %s335
    %p339 = pneg %p333
    %p340 = scmp.eq.s32.totalorder %s20, 1
    %p341 = por %p339, %p340
    %p342 = scmp.ne.s32.totalorder %s334, %s337
    %p343 = scmp.eq.s32.totalorder %s20, 0
    %p344 = por %p342, %p343
    %p345 = scmp.ne.s32.totalorder %s334, %s337
    %p346 = scmp.eq.s32.totalorder %s25, 1
    %p347 = por %p345, %p346
    %p348 = scmp.ne.s32.totalorder %s337, %s338
    %p349 = scmp.eq.s32.totalorder %s25, 0
    %p350 = por %p348, %p349
    %p351 = scmp.ne.s32.totalorder %s337, %s338
    %p352 = scmp.eq.s32.totalorder %s26, 1
    %p353 = por %p351, %p352
    %p355 = scmp.ne.s32.totalorder %s338, %s354
    %p356 = scmp.eq.s32.totalorder %s26, 0
    %p357 = por %p355, %p356
    %p358 = scmp.le.s32.totalorder 1, %s20
    %p359 = scmp.lt.s32.totalorder %s20, 3
    %p360 = pnand %p358, %p359
    %p361 = pneg %p360
    // Predicated region
    $region9: #{diffusiondet_forward.1} parent=5 // pred_check
      _
    $region10: #{diffusiondet_forward.1} parent=5 // pred_check_branch
      %363 = sbr.rel (%p360) target = $region12
    $region11: #{diffusiondet_forward.1} parent=5 // pred_region
      %s364 = ssub.s32 %s20, 1
      // Predicated region
      $region13: #{diffusiondet_forward.1} parent=11 // pred_check
        %p365 = pneg %p67
      $region14: #{diffusiondet_forward.1} parent=11 // pred_check_branch
        %367 = sbr.rel (%p365) target = $region16
      $region15: #{diffusiondet_forward.1} parent=11 // pred_region
        _
      $region16: #{diffusiondet_forward.1} parent=11 // pred_fallthru
        _
      // Predicated region
      $region17: #{diffusiondet_forward.1} parent=11 // pred_check
        %p368 = pneg %p88
      $region18: #{diffusiondet_forward.1} parent=11 // pred_check_branch
        %370 = sbr.rel (%p368) target = $region20
      $region19: #{diffusiondet_forward.1} parent=11 // pred_region
        _
      $region20: #{diffusiondet_forward.1} parent=11 // pred_fallthru
        _
      // Predicated region
      $region21: #{diffusiondet_forward.1} parent=11 // pred_check
        %p371 = pneg %p109
      $region22: #{diffusiondet_forward.1} parent=11 // pred_check_branch
        %373 = sbr.rel (%p371) target = $region24
      $region23: #{diffusiondet_forward.1} parent=11 // pred_region
        _
      $region24: #{diffusiondet_forward.1} parent=11 // pred_fallthru
        _
      // Predicated region
      $region25: #{diffusiondet_forward.1} parent=11 // pred_check
        %p374 = pneg %p130
      $region26: #{diffusiondet_forward.1} parent=11 // pred_check_branch
        %376 = sbr.rel (%p374) target = $region28
      $region27: #{diffusiondet_forward.1} parent=11 // pred_region
        _
      $region28: #{diffusiondet_forward.1} parent=11 // pred_fallthru
        _
      // Predicated region
      $region29: #{diffusiondet_forward.1} parent=11 // pred_check
        %p377 = pneg %p177
      $region30: #{diffusiondet_forward.1} parent=11 // pred_check_branch
        %379 = sbr.rel (%p377) target = $region32
      $region31: #{diffusiondet_forward.1} parent=11 // pred_region
        _
      $region32: #{diffusiondet_forward.1} parent=11 // pred_fallthru
        _
      // Predicated region
      $region33: #{diffusiondet_forward.1} parent=11 // pred_check
        %p380 = pneg %p198
      $region34: #{diffusiondet_forward.1} parent=11 // pred_check_branch
        %382 = sbr.rel (%p380) target = $region36
      $region35: #{diffusiondet_forward.1} parent=11 // pred_region
        _
      $region36: #{diffusiondet_forward.1} parent=11 // pred_fallthru
        _
      // Predicated region
      $region37: #{diffusiondet_forward.1} parent=11 // pred_check
        %p383 = pneg %p219
      $region38: #{diffusiondet_forward.1} parent=11 // pred_check_branch
        %385 = sbr.rel (%p383) target = $region40
      $region39: #{diffusiondet_forward.1} parent=11 // pred_region
        _
      $region40: #{diffusiondet_forward.1} parent=11 // pred_fallthru
        _
      // Predicated region
      $region41: #{diffusiondet_forward.1} parent=11 // pred_check
        %p386 = pneg %p240
      $region42: #{diffusiondet_forward.1} parent=11 // pred_check_branch
        %388 = sbr.rel (%p386) target = $region44
      $region43: #{diffusiondet_forward.1} parent=11 // pred_region
        _
      $region44: #{diffusiondet_forward.1} parent=11 // pred_fallthru
        _
      // Predicated region
      $region45: #{diffusiondet_forward.1} parent=11 // pred_check
        %p389 = pneg %p261
      $region46: #{diffusiondet_forward.1} parent=11 // pred_check_branch
        %391 = sbr.rel (%p389) target = $region48
      $region47: #{diffusiondet_forward.1} parent=11 // pred_region
        _
      $region48: #{diffusiondet_forward.1} parent=11 // pred_fallthru
        _
      // Predicated region
      $region49: #{diffusiondet_forward.1} parent=11 // pred_check
        %p392 = pneg %p282
      $region50: #{diffusiondet_forward.1} parent=11 // pred_check_branch
        %394 = sbr.rel (%p392) target = $region52
      $region51: #{diffusiondet_forward.1} parent=11 // pred_region
        _
      $region52: #{diffusiondet_forward.1} parent=11 // pred_fallthru
        _
      // Predicated region
      $region53: #{diffusiondet_forward.1} parent=11 // pred_check
        %p395 = pneg %p303
      $region54: #{diffusiondet_forward.1} parent=11 // pred_check_branch
        %397 = sbr.rel (%p395) target = $region56
      $region55: #{diffusiondet_forward.1} parent=11 // pred_region
        _
      $region56: #{diffusiondet_forward.1} parent=11 // pred_fallthru
        _
      // Predicated region
      $region57: #{diffusiondet_forward.1} parent=11 // pred_check
        %p398 = pneg %p324
      $region58: #{diffusiondet_forward.1} parent=11 // pred_check_branch
        %400 = sbr.rel (%p398) target = $region60
      $region59: #{diffusiondet_forward.1} parent=11 // pred_region
        _
      $region60: #{diffusiondet_forward.1} parent=11 // pred_fallthru
        _
    $region12: #{diffusiondet_forward.1} parent=5 // pred_fallthru
      _
    %p401 = scmp.lt.s32.totalorder %s20, 2
    // Predicated region
    $region61: #{diffusiondet_forward.1} parent=5 // pred_check
      %p402 = pneg %p401
    $region62: #{diffusiondet_forward.1} parent=5 // pred_check_branch
      %404 = sbr.rel (%p402) target = $region64
    $region63: #{diffusiondet_forward.1} parent=5 // pred_region
      // Predicated region
      $region65: #{diffusiondet_forward.1} parent=63 // pred_check
        %p405 = pneg %p40
      $region66: #{diffusiondet_forward.1} parent=63 // pred_check_branch
        %407 = sbr.rel (%p405) target = $region68
      $region67: #{diffusiondet_forward.1} parent=63 // pred_region
        %s408 = smul.u32 8, %s20
        %p409 = scmp.lt.s32.totalorder %s408, 15
        %s410 = scalar_select %p409, %s408, 15
        %s411 = smul.addr %s410, 4
        %s412 = scalar_lea.vmem %s0, %s411
        %s413 = smul.u32 8, %s20
      $region68: #{diffusiondet_forward.1} parent=63 // pred_fallthru
        _
      // Predicated region
      $region69: #{diffusiondet_forward.1} parent=63 // pred_check
        %p414 = pneg %p150
      $region70: #{diffusiondet_forward.1} parent=63 // pred_check_branch
        %416 = sbr.rel (%p414) target = $region72
      $region71: #{diffusiondet_forward.1} parent=63 // pred_region
        %p417 = scmp.lt.s32.totalorder %s20, 1
        %s418 = scalar_select %p417, %s20, 1
        %s419 = smul.addr %s418, 4
        %s420 = scalar_lea.vmem %s5, %s419
      $region72: #{diffusiondet_forward.1} parent=63 // pred_fallthru
        _
    $region64: #{diffusiondet_forward.1} parent=5 // pred_fallthru
      _
    %p421 = scmp.le.s32.totalorder 1, %s20
    %p422 = scmp.lt.s32.totalorder %s20, 3
    %p423 = pnand %p421, %p422
    %p424 = pneg %p423
    // Predicated region
    $region73: #{diffusiondet_forward.1} parent=5 // pred_check
      _
    $region74: #{diffusiondet_forward.1} parent=5 // pred_check_branch
      %426 = sbr.rel (%p423) target = $region76
    $region75: #{diffusiondet_forward.1} parent=5 // pred_region
      %s427 = ssub.s32 %s20, 1
      %s428 = smul.u32 8, %s25
      %p429 = scmp.lt.s32.totalorder %s428, 15
      %s430 = scalar_select %p429, %s428, 15
      %s431 = smul.addr %s430, 4
      %s432 = scalar_lea.vmem %s0, %s431
      %p433 = pneg %p46
      %p434 = pneg %p43
      %p435 = pneg %p67
      %p436 = pneg %p64
      %p437 = pneg %p88
      %p438 = pneg %p85
      %p439 = pneg %p109
      %p440 = pneg %p106
      %p441 = pneg %p130
      %p442 = pneg %p127
      %p443 = scmp.lt.s32.totalorder %s25, 1
      %s444 = scalar_select %p443, %s25, 1
      %s445 = smul.addr %s444, 4
      %s446 = scalar_lea.vmem %s5, %s445
      %p447 = pneg %p156
      %p448 = pneg %p153
      %p449 = pneg %p177
      %p450 = pneg %p174
      %p451 = pneg %p198
      %p452 = pneg %p195
      %p453 = pneg %p219
      %p454 = pneg %p216
      %p455 = pneg %p240
      %p456 = pneg %p237
      %p457 = pneg %p261
      %p458 = pneg %p258
      %p459 = pneg %p282
      %p460 = pneg %p279
      %p461 = pneg %p303
      %p462 = pneg %p300
      %p463 = pneg %p324
      %p464 = pneg %p321
      %p465 = pneg %p350
      %p466 = pneg %p347
      %p467 = scmp.lt.s32.totalorder %s25, 1
      %s468 = scalar_select %p467, %s25, 1
      %s469 = smul.addr %s468, 8
      %s470 = scalar_lea.vmem %s14, %s469
      %s471 = smul.u32 8, %s25
      %p472 = scmp.lt.s32.totalorder %s471, 15
      %s473 = scalar_select %p472, %s471, 15
      %s474 = smul.addr %s473, 4
      %s475 = scalar_lea.vmem %s0, %s474
      %s476 = smul.u32 8, %s25
      %p477 = scmp.lt.s32.totalorder %s25, 1
      %s478 = scalar_select %p477, %s25, 1
      %s479 = smul.addr %s478, 4
      %s480 = scalar_lea.vmem %s5, %s479
      %p481 = scmp.lt.s32.totalorder %s25, 1
      %s482 = scalar_select %p481, %s25, 1
      %s483 = smul.addr %s482, 8
      %s484 = scalar_lea.vmem %s14, %s483
      %v486 = vld [vmem:[%s475] sm:$0xf]
      %v487 = vld [vmem:[%s475 + $0x4] sm:$0xf]
      %v488 = vld [vmem:[%s475 + $0x8] sm:$0xf]
      %v489 = vld [vmem:[%s475 + $0xc] sm:$0xf]
      %v490 = vld [vmem:[%s475 + $0x10] sm:$0xf]
      %v491 = vld [vmem:[%s475 + $0x14] sm:$0xf]
      %v492 = vld [vmem:[%s475 + $0x18] sm:$0xf]
      %v493 = vld [vmem:[%s475 + $0x1c] sm:$0xf]
      %v494 = vld [vmem:[%s1] sm:$0xf]
      %v495 = vld [vmem:[%s1 + $0x4] sm:$0xf]
      %v496 = vld [vmem:[%s1 + $0x8] sm:$0xf]
      %v497 = vld [vmem:[%s1 + $0xc] sm:$0xf]
      %v498 = vld [vmem:[%s1 + $0x10] sm:$0xf]
      %v499 = vld [vmem:[%s1 + $0x14] sm:$0xf]
      %v500 = vld [vmem:[%s1 + $0x18] sm:$0xf]
      %v501 = vld [vmem:[%s1 + $0x1c] sm:$0xf]
      %v502 = vld [vmem:[%s1 + $0x20] sm:$0xf]
      %v503 = vld [vmem:[%s2] sm:$0x1]
      %v505 = vlaneseq
      %v506 = vshrl.u32 %v505, 7
      %v507 = vsub.s32 0, %v506
      %v508 = vrot.slane %v503, %v507
      %v518 = vunpack.c.l.b16 %v486
      %v519 = vunpack.c.l.b16 %v487
      %v520 = vunpack.c.l.b16 %v488
      %v521 = vunpack.c.l.b16 %v489
      %v522 = vunpack.c.l.b16 %v490
      %v523 = vunpack.c.l.b16 %v491
      %v524 = vunpack.c.l.b16 %v492
      %v525 = vunpack.c.l.b16 %v493
      %v526 = vpack.c.b16 %v519, %v518
      %v527 = vpack.c.b16 %v521, %v520
      %v528 = vpack.c.b16 %v523, %v522
      %v529 = vpack.c.b16 %v525, %v524
      %v539 = vunpack.c.l.b16 %v494
      %v540 = vunpack.c.l.b16 %v495
      %v541 = vunpack.c.l.b16 %v496
      %v542 = vunpack.c.l.b16 %v497
      %v543 = vunpack.c.l.b16 %v498
      %v544 = vunpack.c.l.b16 %v499
      %v545 = vunpack.c.l.b16 %v500
      %v546 = vunpack.c.l.b16 %v501
      %v547 = vunpack.c.l.b16 %v502
      %v548 = vpack.c.b16 %v540, %v539
      %v549 = vpack.c.b16 %v542, %v541
      %v550 = vpack.c.b16 %v544, %v543
      %v551 = vpack.c.b16 %v546, %v545
      %v552 = vpack.c.b16 %v547, %v547
      %vm557 = vcmask 588800
      %v559 = vsel %vm557, %v526, 0
      %v562 = vsel %vm557, %v527, 0
      %v565 = vsel %vm557, %v528, 0
      %v568 = vsel %vm557, %v529, 0
      %vm570 = vcmask 1043456
      %v572 = vsel %vm570, %v552, 0
      %574 = vmatprep.subr.bf16.mxu0 0
      %575 = vmatpush1.bf16.msra.mxu0 %v548
      %576 = vmatprep.subr.bf16.mxu0 0
      %577 = vmatpush1.bf16.msra.mxu0 %v549
      %578 = vmatprep.subr.bf16.mxu0 0
      %579 = vmatpush1.bf16.msra.mxu0 %v550
      %580 = vmatprep.subr.bf16.mxu0 0
      %581 = vmatpush1.bf16.msra.mxu0 %v551
      %582 = vmatprep.subr.bf16.mxu0 0
      %583 = vmatpush1.bf16.msra.mxu0 %v572
      %584 = vmatprep.subr.bf16.mxu0 0
      %585 = vmatpush1.bf16.msra.mxu0 0
      %586 = vmatprep.subr.bf16.mxu0 0
      %587 = vmatpush1.bf16.msra.mxu0 0
      %588 = vmatprep.subr.bf16.mxu0 0
      %589 = vmatpush1.bf16.msra.mxu0 0
      %590 = vmatprep.subr.bf16.mxu0 0
      %591 = vmatpush1.bf16.msra.mxu0 0
      %592 = vmatprep.subr.bf16.mxu0 0
      %593 = vmatpush1.bf16.msra.mxu0 0
      %594 = vmatprep.subr.bf16.mxu0 0
      %595 = vmatpush1.bf16.msra.mxu0 0
      %596 = vmatprep.subr.bf16.mxu0 0
      %597 = vmatpush1.bf16.msra.mxu0 0
      %598 = vmatprep.subr.bf16.mxu0 0
      %599 = vmatpush1.bf16.msra.mxu0 0
      %600 = vmatprep.subr.bf16.mxu0 0
      %601 = vmatpush1.bf16.msra.mxu0 0
      %602 = vmatprep.subr.bf16.mxu0 0
      %603 = vmatpush1.bf16.msra.mxu0 0
      %604 = vmatprep.subr.bf16.mxu0 0
      %605 = vmatpush1.bf16.msra.mxu0 0
      %606 = vmatprep.mubr.bf16.mxu0 0
      %607 = vmatmul.mubr.bf16.gmra.mrb[0].mxu0 %v559
      %v608 = vpop.f32.mrb[0].mxu0
      %v609 = vadd.f32 %v508, %v608
      %v610 = vpop.f32.mrb[0].mxu0
      %v611 = vpop.f32.mrb[0].mxu0
      %v612 = vadd.f32 %v508, %v611
      %v613 = vpop.f32.mrb[0].mxu0
      %614 = vmatprep.mubr.bf16.mxu0 0
      %615 = vmatmul.mubr.bf16.gmra.mrb[0].mxu0 %v562
      %v616 = vpop.f32.mrb[0].mxu0
      %v617 = vadd.f32 %v508, %v616
      %v618 = vpop.f32.mrb[0].mxu0
      %v619 = vpop.f32.mrb[0].mxu0
      %v620 = vadd.f32 %v508, %v619
      %v621 = vpop.f32.mrb[0].mxu0
      %622 = vmatprep.mubr.bf16.mxu0 0
      %623 = vmatmul.mubr.bf16.gmra.mrb[0].mxu0 %v565
      %v624 = vpop.f32.mrb[0].mxu0
      %v625 = vadd.f32 %v508, %v624
      %v626 = vpop.f32.mrb[0].mxu0
      %v627 = vpop.f32.mrb[0].mxu0
      %v628 = vadd.f32 %v508, %v627
      %v629 = vpop.f32.mrb[0].mxu0
      %630 = vmatprep.mubr.bf16.mxu0 0
      %631 = vmatmul.mubr.bf16.gmra.mrb[0].mxu0 %v568
      %v632 = vpop.f32.mrb[0].mxu0
      %v633 = vadd.f32 %v508, %v632
      %v634 = vpop.f32.mrb[0].mxu0
      %v635 = vpop.f32.mrb[0].mxu0
      %v636 = vadd.f32 %v508, %v635
      %v637 = vpop.f32.mrb[0].mxu0
      %638 = vdwg.mxu0
      %v639 = vmax.f32 %v609, 0.0
      %v640 = vmax.f32 %v612, 0.0
      %v641 = vmax.f32 %v617, 0.0
      %v642 = vmax.f32 %v620, 0.0
      %v643 = vmax.f32 %v625, 0.0
      %v644 = vmax.f32 %v628, 0.0
      %v645 = vmax.f32 %v633, 0.0
      %v646 = vmax.f32 %v636, 0.0
      %v647 = vlaneseq
      %v648 = vshrl.u32 %v647, 7
      %v649 = vadd.s32 %v648, 8
      %vm650 = vcmp.lt.s32.totalorder %v648, 0
      %v651 = vsub.s32 0, %v648
      %v652 = vsel %vm650, %v651, %v648
      %v653 = vshrl.u32 %v652, 2
      %v654 = vand.u32 %v652, 3
      %v655 = vsub.s32 0, %v654
      %v656 = vsel %vm650, %v655, %v654
      %vm657 = vcmp.lt.s32.totalorder %v649, 0
      %v658 = vsub.s32 0, %v649
      %v659 = vsel %vm657, %v658, %v649
      %v660 = vshrl.u32 %v659, 2
      %v661 = vand.u32 %v659, 3
      %v662 = vsub.s32 0, %v661
      %v663 = vsel %vm657, %v662, %v661
      %vm664 = vcmp.ne.s32.totalorder %v656, 0
      %vm665 = vcmp.ne.s32.totalorder %v663, 0
      %vm666 = vcmp.lt.s32.totalorder %v656, 0
      %vm667 = vcmp.lt.s32.totalorder %v663, 0
      %vm668 = vmand %vm666, %vm664
      %vm669 = vmand %vm667, %vm665
      %v670 = vadd.s32 %v656, 4
      %v671 = vadd.s32 %v663, 4
      %v672 = vsel %vm668, %v670, %v656
      %v673 = vsel %vm669, %v671, %v663
      %vm674 = vcmp.eq.s32.totalorder %v672, 0
      %vm675 = vcmp.eq.s32.totalorder %v673, 0
      %vm678 = vcmask 1044480
      %v679 = vrot.slane %v645, 3
      %v680 = vrot.slane %v646, 3
      %v681 = vsel %vm678, %v679, %v680
      %v684 = vsel %vm678, 0.0, %v679
      %v685 = vsel %vm674, 0.0, %v684
      %v686 = vsel %vm675, 0.0, %v681
      %v689 = vrot.slane %v643, 4
      %v690 = vrot.slane %v644, 4
      %v691 = vsel %vm570, %v689, %v690
      %v693 = vsel %vm570, 0.0, %v689
      %v694 = vrot.slane %v645, 4
      %v695 = vrot.slane %v646, 4
      %v696 = vsel %vm570, %v694, %v695
      %v698 = vsel %vm570, 0.0, %v694
      %vm701 = vcmask 1040384
      %v702 = vrot.slane %v641, 7
      %v703 = vrot.slane %v642, 7
      %v704 = vsel %vm701, %v702, %v703
      %v707 = vsel %vm701, 0.0, %v702
      %v708 = vsel %vm674, 0.0, %v707
      %v709 = vsel %vm675, 0.0, %v704
      %v710 = vrot.slane %v645, 7
      %v711 = vrot.slane %v646, 7
      %v712 = vsel %vm701, %v710, %v711
      %v715 = vsel %vm701, 0.0, %v710
      %v716 = vsel %vm674, 0.0, %v715
      %v717 = vsel %vm675, 0.0, %v712
      %719 = vrot.lane.b32.xlu0 %v693, 8
      %v720 = vpop.permute.xlu0 %719
      %721 = vrot.lane.b32.xlu0 %v691, 8
      %v722 = vpop.permute.xlu0 %721
      %726 = vrot.lane.b32.xlu0 %v698, 16
      %v727 = vpop.permute.xlu0 %726
      %728 = vrot.lane.b32.xlu0 %v696, 16
      %v729 = vpop.permute.xlu0 %728
      %734 = vrot.lane.b32.xlu0 %v708, 24
      %v735 = vpop.permute.xlu0 %734
      %736 = vrot.lane.b32.xlu0 %v709, 24
      %v737 = vpop.permute.xlu0 %736
      %742 = vrot.lane.b32.xlu0 %v639, 32
      %v743 = vpop.permute.xlu0 %742
      %744 = vrot.lane.b32.xlu0 %v640, 32
      %v745 = vpop.permute.xlu0 %744
      %748 = vrot.lane.b32.xlu0 %v641, 40
      %v749 = vpop.permute.xlu0 %748
      %750 = vrot.lane.b32.xlu0 %v642, 40
      %v751 = vpop.permute.xlu0 %750
      %756 = vrot.lane.b32.xlu0 %v716, 48
      %v757 = vpop.permute.xlu0 %756
      %758 = vrot.lane.b32.xlu0 %v717, 48
      %v759 = vpop.permute.xlu0 %758
      %762 = vrot.lane.b32.xlu0 %v643, 56
      %v763 = vpop.permute.xlu0 %762
      %764 = vrot.lane.b32.xlu0 %v644, 56
      %v765 = vpop.permute.xlu0 %764
      %768 = vrot.lane.b32.xlu0 %v645, 64
      %v769 = vpop.permute.xlu0 %768
      %770 = vrot.lane.b32.xlu0 %v646, 64
      %v771 = vpop.permute.xlu0 %770
      %vm774 = vcmask 64512
      %v775 = vsel %vm774, %v685, %v720
      %v776 = vsel %vm774, %v686, %v722
      %vm777 = vcmask 130048
      %v778 = vsel %vm777, %v775, %v727
      %v779 = vsel %vm777, %v776, %v729
      %vm780 = vcmask 195584
      %v781 = vsel %vm780, %v778, %v735
      %v782 = vsel %vm780, %v779, %v737
      %vm783 = vcmask 261120
      %v784 = vsel %vm783, %v781, %v743
      %v785 = vsel %vm783, %v782, %v745
      %vm786 = vcmask 326656
      %v787 = vsel %vm786, %v784, %v749
      %v788 = vsel %vm786, %v785, %v751
      %vm789 = vcmask 392192
      %v790 = vsel %vm789, %v787, %v757
      %v791 = vsel %vm789, %v788, %v759
      %vm792 = vcmask 457728
      %v793 = vsel %vm792, %v790, %v763
      %v794 = vsel %vm792, %v791, %v765
      %vm795 = vcmask 523264
      %v796 = vsel %vm795, %v793, %v769
      %v797 = vsel %vm795, %v794, %v771
      %v798 = vpack.c.bf16 %v797, %v796
      %v799 = vld [vmem:[%s3] sm:$0xf]
      %v800 = vld [vmem:[%s3 + $0x4] sm:$0xf]
      %v801 = vld [vmem:[%s3 + $0x8] sm:$0xf]
      %v802 = vld [vmem:[%s3 + $0xc] sm:$0xf]
      %v803 = vld [vmem:[%s3 + $0x10] sm:$0xf]
      %v804 = vld [vmem:[%s3 + $0x14] sm:$0xf]
      %v805 = vld [vmem:[%s3 + $0x18] sm:$0xf]
      %v806 = vld [vmem:[%s3 + $0x1c] sm:$0xf]
      %v807 = vld [vmem:[%s3 + $0x20] sm:$0xf]
      %v808 = vld [vmem:[%s4] sm:$0x1]
      %v810 = vlaneseq
      %v811 = vshrl.u32 %v810, 7
      %v812 = vsub.s32 0, %v811
      %v813 = vrot.slane %v808, %v812
      %v824 = vunpack.c.l.b16 %v799
      %v825 = vunpack.c.l.b16 %v800
      %v826 = vunpack.c.l.b16 %v801
      %v827 = vunpack.c.l.b16 %v802
      %v828 = vunpack.c.l.b16 %v803
      %v829 = vunpack.c.l.b16 %v804
      %v830 = vunpack.c.l.b16 %v805
      %v831 = vunpack.c.l.b16 %v806
      %v832 = vunpack.c.l.b16 %v807
      %v833 = vpack.c.b16 %v825, %v824
      %v834 = vpack.c.b16 %v827, %v826
      %v835 = vpack.c.b16 %v829, %v828
      %v836 = vpack.c.b16 %v831, %v830
      %v837 = vpack.c.b16 %v832, %v832
      %v843 = vsel %vm557, %v798, 0
      %v846 = vsel %vm570, %v837, 0
      %848 = vmatprep.subr.bf16.mxu0 0
      %849 = vmatpush1.bf16.msra.mxu0 %v833
      %850 = vmatprep.subr.bf16.mxu0 0
      %851 = vmatpush1.bf16.msra.mxu0 %v834
      %852 = vmatprep.subr.bf16.mxu0 0
      %853 = vmatpush1.bf16.msra.mxu0 %v835
      %854 = vmatprep.subr.bf16.mxu0 0
      %855 = vmatpush1.bf16.msra.mxu0 %v836
      %856 = vmatprep.subr.bf16.mxu0 0
      %857 = vmatpush1.bf16.msra.mxu0 %v846
      %858 = vmatprep.subr.bf16.mxu0 0
      %859 = vmatpush1.bf16.msra.mxu0 0
      %860 = vmatprep.subr.bf16.mxu0 0
      %861 = vmatpush1.bf16.msra.mxu0 0
      %862 = vmatprep.subr.bf16.mxu0 0
      %863 = vmatpush1.bf16.msra.mxu0 0
      %864 = vmatprep.subr.bf16.mxu0 0
      %865 = vmatpush1.bf16.msra.mxu0 0
      %866 = vmatprep.subr.bf16.mxu0 0
      %867 = vmatpush1.bf16.msra.mxu0 0
      %868 = vmatprep.subr.bf16.mxu0 0
      %869 = vmatpush1.bf16.msra.mxu0 0
      %870 = vmatprep.subr.bf16.mxu0 0
      %871 = vmatpush1.bf16.msra.mxu0 0
      %872 = vmatprep.subr.bf16.mxu0 0
      %873 = vmatpush1.bf16.msra.mxu0 0
      %874 = vmatprep.subr.bf16.mxu0 0
      %875 = vmatpush1.bf16.msra.mxu0 0
      %876 = vmatprep.subr.bf16.mxu0 0
      %877 = vmatpush1.bf16.msra.mxu0 0
      %878 = vmatprep.subr.bf16.mxu0 0
      %879 = vmatpush1.bf16.msra.mxu0 0
      %880 = vmatprep.mubr.bf16.mxu0 0
      %881 = vmatmul.mubr.bf16.gmra.mrb[0].mxu0 %v843
      %v882 = vpop.f32.mrb[0].mxu0
      %v883 = vadd.f32 %v813, %v882
      %v884 = vpop.f32.mrb[0].mxu0
      %v885 = vpop.f32.mrb[0].mxu0
      %v886 = vadd.f32 %v813, %v885
      %v887 = vpop.f32.mrb[0].mxu0
      %888 = vdwg.mxu0
      %v889 = vmax.f32 %v883, 0.0
      %v890 = vmax.f32 %v886, 0.0
      %v891 = vsel %vm777, %v889, 0.0
      %v892 = vsel %vm777, %v890, 0.0
      %v893 = vadd.f32 %v891, %v892
      %v894 = vrot.slane %v893, 4
      %v895 = vadd.f32 %v893, %v894
      %v896 = vrot.slane %v895, 2
      %v897 = vadd.f32 %v895, %v896
      %v898 = vrot.slane %v897, 1
      %v899 = vadd.f32 %v897, %v898
      %v900 = vmul.f32 %v899, 0.0625
      %v901 = vpack.c.bf16 %v900, %v900
      %v902 = vld [vmem:[%s6] sm:$0xf]
      %v903 = vld [vmem:[%s6 + $0x4] sm:$0xf]
      %v904 = vld [vmem:[%s7] sm:$0x1]
      %v907 = vunpack.c.l.b16 %v902
      %v908 = vunpack.c.l.b16 %v903
      %v909 = vpack.c.b16 %v908, %v907
      %v912 = vsel %vm777, %v901, 0
      %914 = vmatprep.subr.bf16.mxu0 0
      %915 = vmatpush1.bf16.msra.mxu0 %v909
      %916 = vmatprep.subr.bf16.mxu0 0
      %917 = vmatpush1.bf16.msra.mxu0 0
      %918 = vmatprep.subr.bf16.mxu0 0
      %919 = vmatpush1.bf16.msra.mxu0 0
      %920 = vmatprep.subr.bf16.mxu0 0
      %921 = vmatpush1.bf16.msra.mxu0 0
      %922 = vmatprep.subr.bf16.mxu0 0
      %923 = vmatpush1.bf16.msra.mxu0 0
      %924 = vmatprep.subr.bf16.mxu0 0
      %925 = vmatpush1.bf16.msra.mxu0 0
      %926 = vmatprep.subr.bf16.mxu0 0
      %927 = vmatpush1.bf16.msra.mxu0 0
      %928 = vmatprep.subr.bf16.mxu0 0
      %929 = vmatpush1.bf16.msra.mxu0 0
      %930 = vmatprep.subr.bf16.mxu0 0
      %931 = vmatpush1.bf16.msra.mxu0 0
      %932 = vmatprep.subr.bf16.mxu0 0
      %933 = vmatpush1.bf16.msra.mxu0 0
      %934 = vmatprep.subr.bf16.mxu0 0
      %935 = vmatpush1.bf16.msra.mxu0 0
      %936 = vmatprep.subr.bf16.mxu0 0
      %937 = vmatpush1.bf16.msra.mxu0 0
      %938 = vmatprep.subr.bf16.mxu0 0
      %939 = vmatpush1.bf16.msra.mxu0 0
      %940 = vmatprep.subr.bf16.mxu0 0
      %941 = vmatpush1.bf16.msra.mxu0 0
      %942 = vmatprep.subr.bf16.mxu0 0
      %943 = vmatpush1.bf16.msra.mxu0 0
      %944 = vmatprep.subr.bf16.mxu0 0
      %945 = vmatpush1.bf16.msra.mxu0 0
      %946 = vmatprep.mubr.bf16.mxu0 0
      %947 = vmatmul.mubr.bf16.gmra.mrb[0].mxu0 %v912
      %v948 = vpop.f32.mrb[0].mxu0
      %v949 = vadd.f32 %v904, %v948
      %v950 = vpop.f32.mrb[0].mxu0
      %v951 = vpop.f32.mrb[0].mxu0
      %v952 = vpop.f32.mrb[0].mxu0
      %953 = vdwg.mxu0
      %v954 = vld [vmem:[%s480] sm:$0xf]
      %v955 = vld [vmem:[%s8] sm:$0xf]
      %v956 = vld [vmem:[%s9] sm:$0x1]
      %v958 = vlaneseq
      %v959 = vshrl.u32 %v958, 7
      %v960 = vsub.s32 0, %v959
      %v961 = vrot.slane %v956, %v960
      %v964 = vsel %vm774, %v954, 0
      %v967 = vsel %vm570, %v955, 0
      %969 = vmatprep.subr.bf16.mxu0 0
      %970 = vmatpush1.bf16.msra.mxu0 %v967
      %971 = vmatprep.subr.bf16.mxu0 0
      %972 = vmatpush1.bf16.msra.mxu0 0
      %973 = vmatprep.subr.bf16.mxu0 0
      %974 = vmatpush1.bf16.msra.mxu0 0
      %975 = vmatprep.subr.bf16.mxu0 0
      %976 = vmatpush1.bf16.msra.mxu0 0
      %977 = vmatprep.subr.bf16.mxu0 0
      %978 = vmatpush1.bf16.msra.mxu0 0
      %979 = vmatprep.subr.bf16.mxu0 0
      %980 = vmatpush1.bf16.msra.mxu0 0
      %981 = vmatprep.subr.bf16.mxu0 0
      %982 = vmatpush1.bf16.msra.mxu0 0
      %983 = vmatprep.subr.bf16.mxu0 0
      %984 = vmatpush1.bf16.msra.mxu0 0
      %985 = vmatprep.subr.bf16.mxu0 0
      %986 = vmatpush1.bf16.msra.mxu0 0
      %987 = vmatprep.subr.bf16.mxu0 0
      %988 = vmatpush1.bf16.msra.mxu0 0
      %989 = vmatprep.subr.bf16.mxu0 0
      %990 = vmatpush1.bf16.msra.mxu0 0
      %991 = vmatprep.subr.bf16.mxu0 0
      %992 = vmatpush1.bf16.msra.mxu0 0
      %993 = vmatprep.subr.bf16.mxu0 0
      %994 = vmatpush1.bf16.msra.mxu0 0
      %995 = vmatprep.subr.bf16.mxu0 0
      %996 = vmatpush1.bf16.msra.mxu0 0
      %997 = vmatprep.subr.bf16.mxu0 0
      %998 = vmatpush1.bf16.msra.mxu0 0
      %999 = vmatprep.subr.bf16.mxu0 0
      %1000 = vmatpush1.bf16.msra.mxu0 0
      %1001 = vmatprep.mubr.bf16.mxu0 0
      %1002 = vmatmul.mubr.bf16.gmra.mrb[0].mxu0 %v964
      %v1003 = vpop.f32.mrb[0].mxu0
      %v1004 = vadd.f32 %v961, %v1003
      %v1005 = vpop.f32.mrb[0].mxu0
      %v1006 = vpop.f32.mrb[0].mxu0
      %v1007 = vpop.f32.mrb[0].mxu0
      %1008 = vdwg.mxu0
      %v1009 = vlaneseq
      %v1010 = vshrl.u32 %v1009, 7
      %v1011 = vsub.s32 0, %v1010
      %v1012 = vrot.slane %v949, %v1011
      %v1013 = vadd.f32 %v1004, %v1012
      %v1014 = vmax.f32 %v1013, 0.0
      %v1015 = vpack.c.bf16 %v1014, %v1014
      %v1016 = vld [vmem:[%s10] sm:$0xf]
      %v1017 = vld [vmem:[%s10 + $0x4] sm:$0xf]
      %v1018 = vld [vmem:[%s10 + $0x8] sm:$0xf]
      %v1019 = vld [vmem:[%s10 + $0xc] sm:$0xf]
      %v1020 = vld [vmem:[%s11] sm:$0x1]
      %v1022 = vlaneseq
      %v1023 = vshrl.u32 %v1022, 7
      %v1024 = vsub.s32 0, %v1023
      %v1025 = vrot.slane %v1020, %v1024
      %v1031 = vunpack.c.l.b16 %v1016
      %v1032 = vunpack.c.l.b16 %v1017
      %v1033 = vunpack.c.l.b16 %v1018
      %v1034 = vunpack.c.l.b16 %v1019
      %v1035 = vpack.c.b16 %v1032, %v1031
      %v1036 = vpack.c.b16 %v1034, %v1033
      %v1040 = vsel %vm783, %v1015, 0
      %1042 = vmatprep.subr.bf16.mxu0 0
      %1043 = vmatpush1.bf16.msra.mxu0 %v1035
      %1044 = vmatprep.subr.bf16.mxu0 0
      %1045 = vmatpush1.bf16.msra.mxu0 %v1036
      %1046 = vmatprep.subr.bf16.mxu0 0
      %1047 = vmatpush1.bf16.msra.mxu0 0
      %1048 = vmatprep.subr.bf16.mxu0 0
      %1049 = vmatpush1.bf16.msra.mxu0 0
      %1050 = vmatprep.subr.bf16.mxu0 0
      %1051 = vmatpush1.bf16.msra.mxu0 0
      %1052 = vmatprep.subr.bf16.mxu0 0
      %1053 = vmatpush1.bf16.msra.mxu0 0
      %1054 = vmatprep.subr.bf16.mxu0 0
      %1055 = vmatpush1.bf16.msra.mxu0 0
      %1056 = vmatprep.subr.bf16.mxu0 0
      %1057 = vmatpush1.bf16.msra.mxu0 0
      %1058 = vmatprep.subr.bf16.mxu0 0
      %1059 = vmatpush1.bf16.msra.mxu0 0
      %1060 = vmatprep.subr.bf16.mxu0 0
      %1061 = vmatpush1.bf16.msra.mxu0 0
      %1062 = vmatprep.subr.bf16.mxu0 0
      %1063 = vmatpush1.bf16.msra.mxu0 0
      %1064 = vmatprep.subr.bf16.mxu0 0
      %1065 = vmatpush1.bf16.msra.mxu0 0
      %1066 = vmatprep.subr.bf16.mxu0 0
      %1067 = vmatpush1.bf16.msra.mxu0 0
      %1068 = vmatprep.subr.bf16.mxu0 0
      %1069 = vmatpush1.bf16.msra.mxu0 0
      %1070 = vmatprep.subr.bf16.mxu0 0
      %1071 = vmatpush1.bf16.msra.mxu0 0
      %1072 = vmatprep.subr.bf16.mxu0 0
      %1073 = vmatpush1.bf16.msra.mxu0 0
      %1074 = vmatprep.mubr.bf16.mxu0 0
      %1075 = vmatmul.mubr.bf16.gmra.mrb[0].mxu0 %v1040
      %v1076 = vpop.f32.mrb[0].mxu0
      %v1077 = vadd.f32 %v1025, %v1076
      %v1078 = vpop.f32.mrb[0].mxu0
      %v1079 = vpop.f32.mrb[0].mxu0
      %v1080 = vpop.f32.mrb[0].mxu0
      %1081 = vdwg.mxu0
      %v1082 = vmax.f32 %v1077, 0.0
      %v1083 = vpack.c.bf16 %v1082, %v1082
      %v1084 = vld [vmem:[%s12] sm:$0xf]
      %v1085 = vld [vmem:[%s12 + $0x4] sm:$0xf]
      %v1086 = vld [vmem:[%s12 + $0x8] sm:$0xf]
      %v1087 = vld [vmem:[%s12 + $0xc] sm:$0xf]
      %v1088 = vld [vmem:[%s13] sm:$0x1]
      %v1090 = vlaneseq
      %v1091 = vshrl.u32 %v1090, 7
      %v1092 = vsub.s32 0, %v1091
      %v1093 = vrot.slane %v1088, %v1092
      %v1099 = vunpack.c.l.b16 %v1084
      %v1100 = vunpack.c.l.b16 %v1085
      %v1101 = vunpack.c.l.b16 %v1086
      %v1102 = vunpack.c.l.b16 %v1087
      %v1103 = vpack.c.b16 %v1100, %v1099
      %v1104 = vpack.c.b16 %v1102, %v1101
      %v1108 = vsel %vm783, %v1083, 0
      %1110 = vmatprep.subr.bf16.mxu0 0
      %1111 = vmatpush1.bf16.msra.mxu0 %v1103
      %1112 = vmatprep.subr.bf16.mxu0 0
      %1113 = vmatpush1.bf16.msra.mxu0 %v1104
      %1114 = vmatprep.subr.bf16.mxu0 0
      %1115 = vmatpush1.bf16.msra.mxu0 0
      %1116 = vmatprep.subr.bf16.mxu0 0
      %1117 = vmatpush1.bf16.msra.mxu0 0
      %1118 = vmatprep.subr.bf16.mxu0 0
      %1119 = vmatpush1.bf16.msra.mxu0 0
      %1120 = vmatprep.subr.bf16.mxu0 0
      %1121 = vmatpush1.bf16.msra.mxu0 0
      %1122 = vmatprep.subr.bf16.mxu0 0
      %1123 = vmatpush1.bf16.msra.mxu0 0
      %1124 = vmatprep.subr.bf16.mxu0 0
      %1125 = vmatpush1.bf16.msra.mxu0 0
      %1126 = vmatprep.subr.bf16.mxu0 0
      %1127 = vmatpush1.bf16.msra.mxu0 0
      %1128 = vmatprep.subr.bf16.mxu0 0
      %1129 = vmatpush1.bf16.msra.mxu0 0
      %1130 = vmatprep.subr.bf16.mxu0 0
      %1131 = vmatpush1.bf16.msra.mxu0 0
      %1132 = vmatprep.subr.bf16.mxu0 0
      %1133 = vmatpush1.bf16.msra.mxu0 0
      %1134 = vmatprep.subr.bf16.mxu0 0
      %1135 = vmatpush1.bf16.msra.mxu0 0
      %1136 = vmatprep.subr.bf16.mxu0 0
      %1137 = vmatpush1.bf16.msra.mxu0 0
      %1138 = vmatprep.subr.bf16.mxu0 0
      %1139 = vmatpush1.bf16.msra.mxu0 0
      %1140 = vmatprep.subr.bf16.mxu0 0
      %1141 = vmatpush1.bf16.msra.mxu0 0
      %1142 = vmatprep.mubr.bf16.mxu0 0
      %1143 = vmatmul.mubr.bf16.gmra.mrb[0].mxu0 %v1108
      %v1144 = vpop.f32.mrb[0].mxu0
      %v1145 = vadd.f32 %v1093, %v1144
      %v1146 = vpop.f32.mrb[0].mxu0
      %v1147 = vpop.f32.mrb[0].mxu0
      %v1148 = vpop.f32.mrb[0].mxu0
      %1149 = vdwg.mxu0
      %1150 = vst [vmem:[%s484] sm:$0xff] %v1145
      %p1151 = scmp.lt.s32.totalorder %s25, 1
      %s1152 = scalar_select %p1151, %s25, 1
      %s1153 = smul.addr %s1152, 8
      %s1154 = scalar_lea.vmem %s14, %s1153
      // Predicated region
      $region77: #{diffusiondet_forward.1} parent=75 // pred_check
        %p1155 = pneg %p347
      $region78: #{diffusiondet_forward.1} parent=75 // pred_check_branch
        %1157 = sbr.rel (%p1155) target = $region80
      $region79: #{diffusiondet_forward.1} parent=75 // pred_region
        _
      $region80: #{diffusiondet_forward.1} parent=75 // pred_fallthru
        _
    $region76: #{diffusiondet_forward.1} parent=5 // pred_fallthru
      _
    %p1158 = scmp.le.s32.totalorder 2, %s20
    // Predicated region
    $region81: #{diffusiondet_forward.1} parent=5 // pred_check
      %p1159 = pneg %p1158
    $region82: #{diffusiondet_forward.1} parent=5 // pred_check_branch
      %1161 = sbr.rel (%p1159) target = $region84
    $region83: #{diffusiondet_forward.1} parent=5 // pred_region
      %s1162 = ssub.s32 %s20, 2
      // Predicated region
      $region85: #{diffusiondet_forward.1} parent=83 // pred_check
        %p1163 = pneg %p353
      $region86: #{diffusiondet_forward.1} parent=83 // pred_check_branch
        %1165 = sbr.rel (%p1163) target = $region88
      $region87: #{diffusiondet_forward.1} parent=83 // pred_region
        %p1166 = scmp.lt.s32.totalorder %s26, 1
        %s1167 = scalar_select %p1166, %s26, 1
        %s1168 = smul.addr %s1167, 8
        %s1169 = scalar_lea.vmem %s14, %s1168
      $region88: #{diffusiondet_forward.1} parent=83 // pred_fallthru
        _
    $region84: #{diffusiondet_forward.1} parent=5 // pred_fallthru
      _
  $region6: #{diffusiondet_forward.1} parent=0 // loop_footer
    %s24 = sadd.s32 1, %s20
  $region7: #{diffusiondet_forward.1} parent=0 // loop_footer_branch
    %19 = sbr.rel target = $region3
  $region8: #{diffusiondet_forward.1} parent=0 // loop_exit
    _

</llo_original>
